<compile_context>
chip_gen: v5e
topology: v5e:2x2
jax: 0.10.0
libtpu: 0.0.40
codegen_flags: <defaults>
</compile_context>

<pallas_src>
import jax
import jax.numpy as jnp
from jax.experimental import pallas as pl
from jax.experimental.pallas import tpu as pltpu

_VMEM_LIMIT = 32 * 1024 * 1024        # scoped VMEM: safe on v5e/v6e/v7x
_BLOCK_BUDGET = 8 * 1024 * 1024       # padded bytes per Kernel-A input block


def _round_up(a, b):
    return (a + b - 1) // b * b


def _reduce_lane_tile(c, l, itemsize):
    """Largest lane tile TL (multiple of 128 dividing L, or full L) whose
    lane/sublane-padded footprint fits the per-block budget."""
    pack = max(1, 4 // itemsize)                     # bf16 packs 2 / sublane word
    c_pad = _round_up(c, 8 * pack)

    def footprint(tl):
        return c_pad * _round_up(tl, 128) * itemsize

    cands = [d for d in range(128, l + 1, 128) if l % d == 0]
    if not cands:
        cands = [l]                                  # full-extent block is legal
    best = None
    for d in cands:                                  # ascending -> keep largest fit
        if footprint(d) <= _BLOCK_BUDGET:
            best = d
    return best if best is not None else cands[0]


def _conv_row_tile(h):
    """Largest multiple-of-8 divisor of H up to 128 (bounds the (THB, W) f32
    accumulator's vreg pressure); falls back to full H."""
    best = None
    t = 8
    while t <= min(h, 128):
        if h % t == 0:
            best = t
        t += 8
    return best if best is not None else h


# ----------------------------------------------------------------------------
# Kernel A: per-pixel channel mean & max over the lane-dense flattened layout
#   x block: (1, C, TL) native dtype     m block: (1, 2, TL) f32
# ----------------------------------------------------------------------------
def _sa_reduce_kernel(x_ref, m_ref):
    xb = x_ref[0]                                                  # (C, TL)
    inv_c = 1.0 / xb.shape[0]
    mean = jnp.sum(xb, axis=0, keepdims=True, dtype=jnp.float32) * inv_c
    mx = jnp.max(xb, axis=0, keepdims=True).astype(jnp.float32)
    m_ref[0] = jnp.concatenate([mean, mx], axis=0)                 # (2, TL)


# ----------------------------------------------------------------------------
# Kernel B: 7x7 conv (2 -> 1 channel, no bias) + sigmoid, one output row band
# ----------------------------------------------------------------------------
def _sa_conv_sigmoid_kernel(w_ref, m_ref, o_ref):
    # w_ref: SMEM (98,) f32, index = c*49 + dh*7 + dw
    # m_ref: (1, 2, H+6, W+6) zero-padded mean/max map (full per-batch extent)
    # o_ref: (1, 1, THB, W)  -- one row band of the final output
    thb = o_ref.shape[2]
    w_out = o_ref.shape[3]
    row0 = pl.program_id(1) * thb
    if thb % 8 == 0:
        row0 = pl.multiple_of(row0, 8)
    acc = jnp.zeros((thb, w_out), jnp.float32)
    for c in range(2):
        for dh in range(7):
            for dw in range(7):
                # shifted window straight from the ref: lane/sublane offsets are
                # handled on the load path, keeping the VALU for the MACs only.
                win = m_ref[0, c, pl.ds(row0 + dh, thb), pl.ds(dw, w_out)]
                acc = acc + w_ref[c * 49 + dh * 7 + dw] * win
    o_ref[0, 0] = jax.nn.sigmoid(acc).astype(o_ref.dtype)


# ----------------------------------------------------------------------------
# Forward
# ----------------------------------------------------------------------------
def spatial_attention(x_nchw, w_conv):
    """x_nchw: (N, C, H, W) float32/bfloat16, w_conv: (1, 2, 7, 7).
    Returns (N, 1, H, W) in x's dtype."""
    n, c, h, w = x_nchw.shape
    l = h * w

    # --- Kernel A: channel mean / max over lane-dense (N, C, H*W) -----------
    tl = _reduce_lane_tile(c, l, x_nchw.dtype.itemsize)
    x_flat = x_nchw.reshape(n, c, l)                 # free view, native dtype
    m_flat = pl.pallas_call(
        _sa_reduce_kernel,
        out_shape=jax.ShapeDtypeStruct((n, 2, l), jnp.float32),
        grid_spec=pltpu.PrefetchScalarGridSpec(
            num_scalar_prefetch=0,
            grid=(n, l // tl),
            in_specs=[pl.BlockSpec((1, c, tl), lambda i, j: (i, 0, j))],
            out_specs=pl.BlockSpec((1, 2, tl), lambda i, j: (i, 0, j)),
        ),
        compiler_params=pltpu.CompilerParams(
            dimension_semantics=("parallel", "parallel"),
            vmem_limit_bytes=_VMEM_LIMIT),
    )(x_flat)

    # --- glue: tiny 2-channel map -> zero-padded 2D map for the 7x7 window --
    m_pad = jnp.pad(m_flat.reshape(n, 2, h, w),
                    ((0, 0), (0, 0), (3, 3), (3, 3)))          # (N, 2, H+6, W+6)
    w_flat = w_conv.reshape(-1).astype(jnp.float32)            # (98,) -> SMEM

    # --- Kernel B: fused 7x7 conv + sigmoid, row-tiled over (batch, bands) --
    thb = _conv_row_tile(h)
    out = pl.pallas_call(
        _sa_conv_sigmoid_kernel,
        out_shape=jax.ShapeDtypeStruct((n, 1, h, w), x_nchw.dtype),
        grid_spec=pltpu.PrefetchScalarGridSpec(
            num_scalar_prefetch=0,
            grid=(n, h // thb),
            in_specs=[
                pl.BlockSpec(memory_space=pltpu.MemorySpace.SMEM),
                pl.BlockSpec((1, 2, h + 6, w + 6), lambda i, j: (i, 0, 0, 0)),
            ],
            out_specs=pl.BlockSpec((1, 1, thb, w), lambda i, j: (i, 0, j, 0)),
        ),
        compiler_params=pltpu.CompilerParams(
            dimension_semantics=("parallel", "parallel"),
            vmem_limit_bytes=_VMEM_LIMIT),
    )(w_flat, m_pad)
    return out


# ----------------------------------------------------------------------------
# Pure-JAX reference (same math, no Pallas) for a correctness check
# ----------------------------------------------------------------------------
def spatial_attention_reference(x, w_conv):
    x = x.astype(jnp.float32)
    n, _, h, w = x.shape
    avg = jnp.mean(x, axis=1, keepdims=True)
    mx = jnp.max(x, axis=1, keepdims=True)
    cat = jnp.concatenate([avg, mx], axis=1)                   # (N, 2, H, W)
    catp = jnp.pad(cat, ((0, 0), (0, 0), (3, 3), (3, 3)))
    out = jnp.zeros((n, 1, h, w), jnp.float32)
    for c in range(2):
        for i in range(7):
            for j in range(7):
                out = out + w_conv[0, c, i, j] * catp[:, c:c + 1, i:i + h, j:j + w]
    return jax.nn.sigmoid(out)


if __name__ == "__main__":
    key = jax.random.PRNGKey(0)
    kx, kw = jax.random.split(key)
    x = jax.random.normal(kx, (2, 4, 16, 16), jnp.float32)      # NCHW
    w = jax.random.normal(kw, (1, 2, 7, 7), jnp.float32) * 0.2  # conv1.weight

    fwd = jax.jit(spatial_attention)
    out = fwd(x, w)
    jax.block_until_ready(out)

    ref = spatial_attention_reference(x, w)
    assert out.shape == (2, 1, 16, 16), out.shape
    assert bool(jnp.all(jnp.isfinite(out)))
    max_err = float(jnp.max(jnp.abs(out.astype(jnp.float32) - ref)))
    assert max_err < 1e-3, max_err
    print("KERNEL_OK")
</pallas_src>

<mosaic_0001>
module attributes {stable_mosaic.version = 11 : i64} {
  func.func @_sa_reduce_kernel(%arg0: i32, %arg1: i32, %arg2: memref<1x4x256xf32, #tpu.memory_space<vmem>>, %arg3: memref<1x2x256xf32, #tpu.memory_space<vmem>>) attributes {dimension_semantics = [#tpu.dimension_semantics<parallel>, #tpu.dimension_semantics<parallel>], iteration_bounds = array<i64: 2, 1>, scalar_prefetch = 0 : i64, scratch_operands = 0 : i64, tpu.core_type = #tpu.core_type<tc>, window_params = [{transform_indices = @transform_0, window_bounds = array<i64: 1, 4, 256>}, {transform_indices = @transform_1, window_bounds = array<i64: 1, 2, 256>}]} {
    %c0 = arith.constant 0 : index
    %c0_0 = arith.constant 0 : index
    %c0_1 = arith.constant 0 : index
    %0 = vector.load %arg2[%c0, %c0_0, %c0_1] : memref<1x4x256xf32, #tpu.memory_space<vmem>>, vector<1x4x256xf32>
    %1 = vector.shape_cast %0 : vector<1x4x256xf32> to vector<4x256xf32>
    %cst = arith.constant dense<0.000000e+00> : vector<256xf32>
    %2 = vector.multi_reduction <add>, %1, %cst [0] : vector<4x256xf32> to vector<256xf32>
    %3 = vector.shape_cast %2 : vector<256xf32> to vector<1x256xf32>
    %cst_2 = arith.constant 2.500000e-01 : f32
    %4 = vector.broadcast %cst_2 : f32 to vector<1x256xf32>
    %5 = arith.mulf %3, %4 : vector<1x256xf32>
    %cst_3 = arith.constant dense<0xFF800000> : vector<256xf32>
    %6 = vector.multi_reduction <maximumf>, %1, %cst_3 [0] : vector<4x256xf32> to vector<256xf32>
    %7 = vector.shape_cast %6 : vector<256xf32> to vector<1x256xf32>
    %8 = tpu.concatenate %5, %7 in 0 : vector<1x256xf32>, vector<1x256xf32> -> vector<2x256xf32>
    %c0_4 = arith.constant 0 : index
    %c0_5 = arith.constant 0 : index
    %c0_6 = arith.constant 0 : index
    %9 = vector.load %arg3[%c0_4, %c0_5, %c0_6] : memref<1x2x256xf32, #tpu.memory_space<vmem>>, vector<1x2x256xf32>
    %10 = vector.shape_cast %9 : vector<1x2x256xf32> to vector<2x256xf32>
    %11 = vector.shape_cast %8 : vector<2x256xf32> to vector<1x2x256xf32>
    tpu.vector_store %arg3[%c0_4, %c0_5, %c0_6], %11 {strides = array<i32>} : memref<1x2x256xf32, #tpu.memory_space<vmem>>, vector<1x2x256xf32>,
    return
  }
  func.func @transform_0(%arg0: i32, %arg1: i32) -> (i32, i32, i32) {
    %c0_i32 = arith.constant 0 : i32
    %c0_i32_0 = arith.constant 0 : i32
    return %arg0, %c0_i32, %arg1 : i32, i32, i32
  }
  func.func @transform_1(%arg0: i32, %arg1: i32) -> (i32, i32, i32) {
    %c0_i32 = arith.constant 0 : i32
    %c0_i32_0 = arith.constant 0 : i32
    return %arg0, %c0_i32, %arg1 : i32, i32, i32
  }
}

module attributes {stable_mosaic.version = 11 : i64} {
  func.func @_sa_conv_sigmoid_kernel(%arg0: i32, %arg1: i32, %arg2: memref<98xf32, #tpu.memory_space<smem>>, %arg3: memref<1x2x22x22xf32, #tpu.memory_space<vmem>>, %arg4: memref<1x1x16x16xf32, #tpu.memory_space<vmem>>) attributes {dimension_semantics = [#tpu.dimension_semantics<parallel>, #tpu.dimension_semantics<parallel>], iteration_bounds = array<i64: 2, 1>, scalar_prefetch = 0 : i64, scratch_operands = 0 : i64, tpu.core_type = #tpu.core_type<tc>, window_params = [{transform_indices = @transform_0, window_bounds = array<i64: 98>}, {transform_indices = @transform_1, window_bounds = array<i64: 1, 2, 22, 22>}, {transform_indices = @transform_2, window_bounds = array<i64: 1, 1, 16, 16>}]} {
    %c16_i32 = arith.constant 16 : i32
    %0 = arith.muli %arg1, %c16_i32 : i32
    %1 = tpu.assume_multiple %0, 8 : i32
    %cst = arith.constant 0.000000e+00 : f32
    %2 = vector.broadcast %cst : f32 to vector<16x16xf32>
    %c0_i32 = arith.constant 0 : i32
    %3 = arith.addi %1, %c0_i32 : i32
    %c0 = arith.constant 0 : index
    %c0_0 = arith.constant 0 : index
    %4 = arith.index_cast %3 : i32 to index
    %c0_1 = arith.constant 0 : index
    %5 = vector.load %arg3[%c0, %c0_0, %4, %c0_1] : memref<1x2x22x22xf32, #tpu.memory_space<vmem>>, vector<1x1x16x16xf32>
    %6 = vector.shape_cast %5 : vector<1x1x16x16xf32> to vector<16x16xf32>
    %c0_2 = arith.constant 0 : index
    %7 = memref.load %arg2[%c0_2] : memref<98xf32, #tpu.memory_space<smem>>
    %8 = vector.broadcast %7 : f32 to vector<16x16xf32>
    %9 = arith.mulf %8, %6 : vector<16x16xf32>
    %10 = arith.addf %2, %9 : vector<16x16xf32>
    %c0_i32_3 = arith.constant 0 : i32
    %11 = arith.addi %1, %c0_i32_3 : i32
    %c0_4 = arith.constant 0 : index
    %c0_5 = arith.constant 0 : index
    %12 = arith.index_cast %11 : i32 to index
    %c1 = arith.constant 1 : index
    %13 = vector.load %arg3[%c0_4, %c0_5, %12, %c1] : memref<1x2x22x22xf32, #tpu.memory_space<vmem>>, vector<1x1x16x16xf32>
    %14 = vector.shape_cast %13 : vector<1x1x16x16xf32> to vector<16x16xf32>
    %c1_6 = arith.constant 1 : index
    %15 = memref.load %arg2[%c1_6] : memref<98xf32, #tpu.memory_space<smem>>
    %16 = vector.broadcast %15 : f32 to vector<16x16xf32>
    %17 = arith.mulf %16, %14 : vector<16x16xf32>
    %18 = arith.addf %10, %17 : vector<16x16xf32>
    %c0_i32_7 = arith.constant 0 : i32
    %19 = arith.addi %1, %c0_i32_7 : i32
    %c0_8 = arith.constant 0 : index
    %c0_9 = arith.constant 0 : index
    %20 = arith.index_cast %19 : i32 to index
    %c2 = arith.constant 2 : index
    %21 = vector.load %arg3[%c0_8, %c0_9, %20, %c2] : memref<1x2x22x22xf32, #tpu.memory_space<vmem>>, vector<1x1x16x16xf32>
    %22 = vector.shape_cast %21 : vector<1x1x16x16xf32> to vector<16x16xf32>
    %c2_10 = arith.constant 2 : index
    %23 = memref.load %arg2[%c2_10] : memref<98xf32, #tpu.memory_space<smem>>
    %24 = vector.broadcast %23 : f32 to vector<16x16xf32>
    %25 = arith.mulf %24, %22 : vector<16x16xf32>
    %26 = arith.addf %18, %25 : vector<16x16xf32>
    %c0_i32_11 = arith.constant 0 : i32
    %27 = arith.addi %1, %c0_i32_11 : i32
    %c0_12 = arith.constant 0 : index
    %c0_13 = arith.constant 0 : index
    %28 = arith.index_cast %27 : i32 to index
    %c3 = arith.constant 3 : index
    %29 = vector.load %arg3[%c0_12, %c0_13, %28, %c3] : memref<1x2x22x22xf32, #tpu.memory_space<vmem>>, vector<1x1x16x16xf32>
    %30 = vector.shape_cast %29 : vector<1x1x16x16xf32> to vector<16x16xf32>
    %c3_14 = arith.constant 3 : index
    %31 = memref.load %arg2[%c3_14] : memref<98xf32, #tpu.memory_space<smem>>
    %32 = vector.broadcast %31 : f32 to vector<16x16xf32>
    %33 = arith.mulf %32, %30 : vector<16x16xf32>
    %34 = arith.addf %26, %33 : vector<16x16xf32>
    %c0_i32_15 = arith.constant 0 : i32
    %35 = arith.addi %1, %c0_i32_15 : i32
    %c0_16 = arith.constant 0 : index
    %c0_17 = arith.constant 0 : index
    %36 = arith.index_cast %35 : i32 to index
    %c4 = arith.constant 4 : index
    %37 = vector.load %arg3[%c0_16, %c0_17, %36, %c4] : memref<1x2x22x22xf32, #tpu.memory_space<vmem>>, vector<1x1x16x16xf32>
    %38 = vector.shape_cast %37 : vector<1x1x16x16xf32> to vector<16x16xf32>
    %c4_18 = arith.constant 4 : index
    %39 = memref.load %arg2[%c4_18] : memref<98xf32, #tpu.memory_space<smem>>
    %40 = vector.broadcast %39 : f32 to vector<16x16xf32>
    %41 = arith.mulf %40, %38 : vector<16x16xf32>
    %42 = arith.addf %34, %41 : vector<16x16xf32>
    %c0_i32_19 = arith.constant 0 : i32
    %43 = arith.addi %1, %c0_i32_19 : i32
    %c0_20 = arith.constant 0 : index
    %c0_21 = arith.constant 0 : index
    %44 = arith.index_cast %43 : i32 to index
    %c5 = arith.constant 5 : index
    %45 = vector.load %arg3[%c0_20, %c0_21, %44, %c5] : memref<1x2x22x22xf32, #tpu.memory_space<vmem>>, vector<1x1x16x16xf32>
    %46 = vector.shape_cast %45 : vector<1x1x16x16xf32> to vector<16x16xf32>
    %c5_22 = arith.constant 5 : index
    %47 = memref.load %arg2[%c5_22] : memref<98xf32, #tpu.memory_space<smem>>
    %48 = vector.broadcast %47 : f32 to vector<16x16xf32>
    %49 = arith.mulf %48, %46 : vector<16x16xf32>
    %50 = arith.addf %42, %49 : vector<16x16xf32>
    %c0_i32_23 = arith.constant 0 : i32
    %51 = arith.addi %1, %c0_i32_23 : i32
    %c0_24 = arith.constant 0 : index
    %c0_25 = arith.constant 0 : index
    %52 = arith.index_cast %51 : i32 to index
    %c6 = arith.constant 6 : index
    %53 = vector.load %arg3[%c0_24, %c0_25, %52, %c6] : memref<1x2x22x22xf32, #tpu.memory_space<vmem>>, vector<1x1x16x16xf32>
    %54 = vector.shape_cast %53 : vector<1x1x16x16xf32> to vector<16x16xf32>
    %c6_26 = arith.constant 6 : index
    %55 = memref.load %arg2[%c6_26] : memref<98xf32, #tpu.memory_space<smem>>
    %56 = vector.broadcast %55 : f32 to vector<16x16xf32>
    %57 = arith.mulf %56, %54 : vector<16x16xf32>
    %58 = arith.addf %50, %57 : vector<16x16xf32>
    %c1_i32 = arith.constant 1 : i32
    %59 = arith.addi %1, %c1_i32 : i32
    %c0_27 = arith.constant 0 : index
    %c0_28 = arith.constant 0 : index
    %60 = arith.index_cast %59 : i32 to index
    %c0_29 = arith.constant 0 : index
    %61 = vector.load %arg3[%c0_27, %c0_28, %60, %c0_29] : memref<1x2x22x22xf32, #tpu.memory_space<vmem>>, vector<1x1x16x16xf32>
    %62 = vector.shape_cast %61 : vector<1x1x16x16xf32> to vector<16x16xf32>
    %c7 = arith.constant 7 : index
    %63 = memref.load %arg2[%c7] : memref<98xf32, #tpu.memory_space<smem>>
    %64 = vector.broadcast %63 : f32 to vector<16x16xf32>
    %65 = arith.mulf %64, %62 : vector<16x16xf32>
    %66 = arith.addf %58, %65 : vector<16x16xf32>
    %c1_i32_30 = arith.constant 1 : i32
    %67 = arith.addi %1, %c1_i32_30 : i32
    %c0_31 = arith.constant 0 : index
    %c0_32 = arith.constant 0 : index
    %68 = arith.index_cast %67 : i32 to index
    %c1_33 = arith.constant 1 : index
    %69 = vector.load %arg3[%c0_31, %c0_32, %68, %c1_33] : memref<1x2x22x22xf32, #tpu.memory_space<vmem>>, vector<1x1x16x16xf32>
    %70 = vector.shape_cast %69 : vector<1x1x16x16xf32> to vector<16x16xf32>
    %c8 = arith.constant 8 : index
    %71 = memref.load %arg2[%c8] : memref<98xf32, #tpu.memory_space<smem>>
    %72 = vector.broadcast %71 : f32 to vector<16x16xf32>
    %73 = arith.mulf %72, %70 : vector<16x16xf32>
    %74 = arith.addf %66, %73 : vector<16x16xf32>
    %c1_i32_34 = arith.constant 1 : i32
    %75 = arith.addi %1, %c1_i32_34 : i32
    %c0_35 = arith.constant 0 : index
    %c0_36 = arith.constant 0 : index
    %76 = arith.index_cast %75 : i32 to index
    %c2_37 = arith.constant 2 : index
    %77 = vector.load %arg3[%c0_35, %c0_36, %76, %c2_37] : memref<1x2x22x22xf32, #tpu.memory_space<vmem>>, vector<1x1x16x16xf32>
    %78 = vector.shape_cast %77 : vector<1x1x16x16xf32> to vector<16x16xf32>
    %c9 = arith.constant 9 : index
    %79 = memref.load %arg2[%c9] : memref<98xf32, #tpu.memory_space<smem>>
    %80 = vector.broadcast %79 : f32 to vector<16x16xf32>
    %81 = arith.mulf %80, %78 : vector<16x16xf32>
    %82 = arith.addf %74, %81 : vector<16x16xf32>
    %c1_i32_38 = arith.constant 1 : i32
    %83 = arith.addi %1, %c1_i32_38 : i32
    %c0_39 = arith.constant 0 : index
    %c0_40 = arith.constant 0 : index
    %84 = arith.index_cast %83 : i32 to index
    %c3_41 = arith.constant 3 : index
    %85 = vector.load %arg3[%c0_39, %c0_40, %84, %c3_41] : memref<1x2x22x22xf32, #tpu.memory_space<vmem>>, vector<1x1x16x16xf32>
    %86 = vector.shape_cast %85 : vector<1x1x16x16xf32> to vector<16x16xf32>
    %c10 = arith.constant 10 : index
    %87 = memref.load %arg2[%c10] : memref<98xf32, #tpu.memory_space<smem>>
    %88 = vector.broadcast %87 : f32 to vector<16x16xf32>
    %89 = arith.mulf %88, %86 : vector<16x16xf32>
    %90 = arith.addf %82, %89 : vector<16x16xf32>
    %c1_i32_42 = arith.constant 1 : i32
    %91 = arith.addi %1, %c1_i32_42 : i32
    %c0_43 = arith.constant 0 : index
    %c0_44 = arith.constant 0 : index
    %92 = arith.index_cast %91 : i32 to index
    %c4_45 = arith.constant 4 : index
    %93 = vector.load %arg3[%c0_43, %c0_44, %92, %c4_45] : memref<1x2x22x22xf32, #tpu.memory_space<vmem>>, vector<1x1x16x16xf32>
    %94 = vector.shape_cast %93 : vector<1x1x16x16xf32> to vector<16x16xf32>
    %c11 = arith.constant 11 : index
    %95 = memref.load %arg2[%c11] : memref<98xf32, #tpu.memory_space<smem>>
    %96 = vector.broadcast %95 : f32 to vector<16x16xf32>
    %97 = arith.mulf %96, %94 : vector<16x16xf32>
    %98 = arith.addf %90, %97 : vector<16x16xf32>
    %c1_i32_46 = arith.constant 1 : i32
    %99 = arith.addi %1, %c1_i32_46 : i32
    %c0_47 = arith.constant 0 : index
    %c0_48 = arith.constant 0 : index
    %100 = arith.index_cast %99 : i32 to index
    %c5_49 = arith.constant 5 : index
    %101 = vector.load %arg3[%c0_47, %c0_48, %100, %c5_49] : memref<1x2x22x22xf32, #tpu.memory_space<vmem>>, vector<1x1x16x16xf32>
    %102 = vector.shape_cast %101 : vector<1x1x16x16xf32> to vector<16x16xf32>
    %c12 = arith.constant 12 : index
    %103 = memref.load %arg2[%c12] : memref<98xf32, #tpu.memory_space<smem>>
    %104 = vector.broadcast %103 : f32 to vector<16x16xf32>
    %105 = arith.mulf %104, %102 : vector<16x16xf32>
    %106 = arith.addf %98, %105 : vector<16x16xf32>
    %c1_i32_50 = arith.constant 1 : i32
    %107 = arith.addi %1, %c1_i32_50 : i32
    %c0_51 = arith.constant 0 : index
    %c0_52 = arith.constant 0 : index
    %108 = arith.index_cast %107 : i32 to index
    %c6_53 = arith.constant 6 : index
    %109 = vector.load %arg3[%c0_51, %c0_52, %108, %c6_53] : memref<1x2x22x22xf32, #tpu.memory_space<vmem>>, vector<1x1x16x16xf32>
    %110 = vector.shape_cast %109 : vector<1x1x16x16xf32> to vector<16x16xf32>
    %c13 = arith.constant 13 : index
    %111 = memref.load %arg2[%c13] : memref<98xf32, #tpu.memory_space<smem>>
    %112 = vector.broadcast %111 : f32 to vector<16x16xf32>
    %113 = arith.mulf %112, %110 : vector<16x16xf32>
    %114 = arith.addf %106, %113 : vector<16x16xf32>
    %c2_i32 = arith.constant 2 : i32
    %115 = arith.addi %1, %c2_i32 : i32
    %c0_54 = arith.constant 0 : index
    %c0_55 = arith.constant 0 : index
    %116 = arith.index_cast %115 : i32 to index
    %c0_56 = arith.constant 0 : index
    %117 = vector.load %arg3[%c0_54, %c0_55, %116, %c0_56] : memref<1x2x22x22xf32, #tpu.memory_space<vmem>>, vector<1x1x16x16xf32>
    %118 = vector.shape_cast %117 : vector<1x1x16x16xf32> to vector<16x16xf32>
    %c14 = arith.constant 14 : index
    %119 = memref.load %arg2[%c14] : memref<98xf32, #tpu.memory_space<smem>>
    %120 = vector.broadcast %119 : f32 to vector<16x16xf32>
    %121 = arith.mulf %120, %118 : vector<16x16xf32>
    %122 = arith.addf %114, %121 : vector<16x16xf32>
    %c2_i32_57 = arith.constant 2 : i32
    %123 = arith.addi %1, %c2_i32_57 : i32
    %c0_58 = arith.constant 0 : index
    %c0_59 = arith.constant 0 : index
    %124 = arith.index_cast %123 : i32 to index
    %c1_60 = arith.constant 1 : index
    %125 = vector.load %arg3[%c0_58, %c0_59, %124, %c1_60] : memref<1x2x22x22xf32, #tpu.memory_space<vmem>>, vector<1x1x16x16xf32>
    %126 = vector.shape_cast %125 : vector<1x1x16x16xf32> to vector<16x16xf32>
    %c15 = arith.constant 15 : index
    %127 = memref.load %arg2[%c15] : memref<98xf32, #tpu.memory_space<smem>>
    %128 = vector.broadcast %127 : f32 to vector<16x16xf32>
    %129 = arith.mulf %128, %126 : vector<16x16xf32>
    %130 = arith.addf %122, %129 : vector<16x16xf32>
    %c2_i32_61 = arith.constant 2 : i32
    %131 = arith.addi %1, %c2_i32_61 : i32
    %c0_62 = arith.constant 0 : index
    %c0_63 = arith.constant 0 : index
    %132 = arith.index_cast %131 : i32 to index
    %c2_64 = arith.constant 2 : index
    %133 = vector.load %arg3[%c0_62, %c0_63, %132, %c2_64] : memref<1x2x22x22xf32, #tpu.memory_space<vmem>>, vector<1x1x16x16xf32>
    %134 = vector.shape_cast %133 : vector<1x1x16x16xf32> to vector<16x16xf32>
    %c16 = arith.constant 16 : index
    %135 = memref.load %arg2[%c16] : memref<98xf32, #tpu.memory_space<smem>>
    %136 = vector.broadcast %135 : f32 to vector<16x16xf32>
    %137 = arith.mulf %136, %134 : vector<16x16xf32>
    %138 = arith.addf %130, %137 : vector<16x16xf32>
    %c2_i32_65 = arith.constant 2 : i32
    %139 = arith.addi %1, %c2_i32_65 : i32
    %c0_66 = arith.constant 0 : index
    %c0_67 = arith.constant 0 : index
    %140 = arith.index_cast %139 : i32 to index
    %c3_68 = arith.constant 3 : index
    %141 = vector.load %arg3[%c0_66, %c0_67, %140, %c3_68] : memref<1x2x22x22xf32, #tpu.memory_space<vmem>>, vector<1x1x16x16xf32>
    %142 = vector.shape_cast %141 : vector<1x1x16x16xf32> to vector<16x16xf32>
    %c17 = arith.constant 17 : index
    %143 = memref.load %arg2[%c17] : memref<98xf32, #tpu.memory_space<smem>>
    %144 = vector.broadcast %143 : f32 to vector<16x16xf32>
    %145 = arith.mulf %144, %142 : vector<16x16xf32>
    %146 = arith.addf %138, %145 : vector<16x16xf32>
    %c2_i32_69 = arith.constant 2 : i32
    %147 = arith.addi %1, %c2_i32_69 : i32
    %c0_70 = arith.constant 0 : index
    %c0_71 = arith.constant 0 : index
    %148 = arith.index_cast %147 : i32 to index
    %c4_72 = arith.constant 4 : index
    %149 = vector.load %arg3[%c0_70, %c0_71, %148, %c4_72] : memref<1x2x22x22xf32, #tpu.memory_space<vmem>>, vector<1x1x16x16xf32>
    %150 = vector.shape_cast %149 : vector<1x1x16x16xf32> to vector<16x16xf32>
    %c18 = arith.constant 18 : index
    %151 = memref.load %arg2[%c18] : memref<98xf32, #tpu.memory_space<smem>>
    %152 = vector.broadcast %151 : f32 to vector<16x16xf32>
    %153 = arith.mulf %152, %150 : vector<16x16xf32>
    %154 = arith.addf %146, %153 : vector<16x16xf32>
    %c2_i32_73 = arith.constant 2 : i32
    %155 = arith.addi %1, %c2_i32_73 : i32
    %c0_74 = arith.constant 0 : index
    %c0_75 = arith.constant 0 : index
    %156 = arith.index_cast %155 : i32 to index
    %c5_76 = arith.constant 5 : index
    %157 = vector.load %arg3[%c0_74, %c0_75, %156, %c5_76] : memref<1x2x22x22xf32, #tpu.memory_space<vmem>>, vector<1x1x16x16xf32>
    %158 = vector.shape_cast %157 : vector<1x1x16x16xf32> to vector<16x16xf32>
    %c19 = arith.constant 19 : index
    %159 = memref.load %arg2[%c19] : memref<98xf32, #tpu.memory_space<smem>>
    %160 = vector.broadcast %159 : f32 to vector<16x16xf32>
    %161 = arith.mulf %160, %158 : vector<16x16xf32>
    %162 = arith.addf %154, %161 : vector<16x16xf32>
    %c2_i32_77 = arith.constant 2 : i32
    %163 = arith.addi %1, %c2_i32_77 : i32
    %c0_78 = arith.constant 0 : index
    %c0_79 = arith.constant 0 : index
    %164 = arith.index_cast %163 : i32 to index
    %c6_80 = arith.constant 6 : index
    %165 = vector.load %arg3[%c0_78, %c0_79, %164, %c6_80] : memref<1x2x22x22xf32, #tpu.memory_space<vmem>>, vector<1x1x16x16xf32>
    %166 = vector.shape_cast %165 : vector<1x1x16x16xf32> to vector<16x16xf32>
    %c20 = arith.constant 20 : index
    %167 = memref.load %arg2[%c20] : memref<98xf32, #tpu.memory_space<smem>>
    %168 = vector.broadcast %167 : f32 to vector<16x16xf32>
    %169 = arith.mulf %168, %166 : vector<16x16xf32>
    %170 = arith.addf %162, %169 : vector<16x16xf32>
    %c3_i32 = arith.constant 3 : i32
    %171 = arith.addi %1, %c3_i32 : i32
    %c0_81 = arith.constant 0 : index
    %c0_82 = arith.constant 0 : index
    %172 = arith.index_cast %171 : i32 to index
    %c0_83 = arith.constant 0 : index
    %173 = vector.load %arg3[%c0_81, %c0_82, %172, %c0_83] : memref<1x2x22x22xf32, #tpu.memory_space<vmem>>, vector<1x1x16x16xf32>
    %174 = vector.shape_cast %173 : vector<1x1x16x16xf32> to vector<16x16xf32>
    %c21 = arith.constant 21 : index
    %175 = memref.load %arg2[%c21] : memref<98xf32, #tpu.memory_space<smem>>
    %176 = vector.broadcast %175 : f32 to vector<16x16xf32>
    %177 = arith.mulf %176, %174 : vector<16x16xf32>
    %178 = arith.addf %170, %177 : vector<16x16xf32>
    %c3_i32_84 = arith.constant 3 : i32
    %179 = arith.addi %1, %c3_i32_84 : i32
    %c0_85 = arith.constant 0 : index
    %c0_86 = arith.constant 0 : index
    %180 = arith.index_cast %179 : i32 to index
    %c1_87 = arith.constant 1 : index
    %181 = vector.load %arg3[%c0_85, %c0_86, %180, %c1_87] : memref<1x2x22x22xf32, #tpu.memory_space<vmem>>, vector<1x1x16x16xf32>
    %182 = vector.shape_cast %181 : vector<1x1x16x16xf32> to vector<16x16xf32>
    %c22 = arith.constant 22 : index
    %183 = memref.load %arg2[%c22] : memref<98xf32, #tpu.memory_space<smem>>
    %184 = vector.broadcast %183 : f32 to vector<16x16xf32>
    %185 = arith.mulf %184, %182 : vector<16x16xf32>
    %186 = arith.addf %178, %185 : vector<16x16xf32>
    %c3_i32_88 = arith.constant 3 : i32
    %187 = arith.addi %1, %c3_i32_88 : i32
    %c0_89 = arith.constant 0 : index
    %c0_90 = arith.constant 0 : index
    %188 = arith.index_cast %187 : i32 to index
    %c2_91 = arith.constant 2 : index
    %189 = vector.load %arg3[%c0_89, %c0_90, %188, %c2_91] : memref<1x2x22x22xf32, #tpu.memory_space<vmem>>, vector<1x1x16x16xf32>
    %190 = vector.shape_cast %189 : vector<1x1x16x16xf32> to vector<16x16xf32>
    %c23 = arith.constant 23 : index
    %191 = memref.load %arg2[%c23] : memref<98xf32, #tpu.memory_space<smem>>
    %192 = vector.broadcast %191 : f32 to vector<16x16xf32>
    %193 = arith.mulf %192, %190 : vector<16x16xf32>
    %194 = arith.addf %186, %193 : vector<16x16xf32>
    %c3_i32_92 = arith.constant 3 : i32
    %195 = arith.addi %1, %c3_i32_92 : i32
    %c0_93 = arith.constant 0 : index
    %c0_94 = arith.constant 0 : index
    %196 = arith.index_cast %195 : i32 to index
    %c3_95 = arith.constant 3 : index
    %197 = vector.load %arg3[%c0_93, %c0_94, %196, %c3_95] : memref<1x2x22x22xf32, #tpu.memory_space<vmem>>, vector<1x1x16x16xf32>
    %198 = vector.shape_cast %197 : vector<1x1x16x16xf32> to vector<16x16xf32>
    %c24 = arith.constant 24 : index
    %199 = memref.load %arg2[%c24] : memref<98xf32, #tpu.memory_space<smem>>
    %200 = vector.broadcast %199 : f32 to vector<16x16xf32>
    %201 = arith.mulf %200, %198 : vector<16x16xf32>
    %202 = arith.addf %194, %201 : vector<16x16xf32>
    %c3_i32_96 = arith.constant 3 : i32
    %203 = arith.addi %1, %c3_i32_96 : i32
    %c0_97 = arith.constant 0 : index
    %c0_98 = arith.constant 0 : index
    %204 = arith.index_cast %203 : i32 to index
    %c4_99 = arith.constant 4 : index
    %205 = vector.load %arg3[%c0_97, %c0_98, %204, %c4_99] : memref<1x2x22x22xf32, #tpu.memory_space<vmem>>, vector<1x1x16x16xf32>
    %206 = vector.shape_cast %205 : vector<1x1x16x16xf32> to vector<16x16xf32>
    %c25 = arith.constant 25 : index
    %207 = memref.load %arg2[%c25] : memref<98xf32, #tpu.memory_space<smem>>
    %208 = vector.broadcast %207 : f32 to vector<16x16xf32>
    %209 = arith.mulf %208, %206 : vector<16x16xf32>
    %210 = arith.addf %202, %209 : vector<16x16xf32>
    %c3_i32_100 = arith.constant 3 : i32
    %211 = arith.addi %1, %c3_i32_100 : i32
    %c0_101 = arith.constant 0 : index
    %c0_102 = arith.constant 0 : index
    %212 = arith.index_cast %211 : i32 to index
    %c5_103 = arith.constant 5 : index
    %213 = vector.load %arg3[%c0_101, %c0_102, %212, %c5_103] : memref<1x2x22x22xf32, #tpu.memory_space<vmem>>, vector<1x1x16x16xf32>
    %214 = vector.shape_cast %213 : vector<1x1x16x16xf32> to vector<16x16xf32>
    %c26 = arith.constant 26 : index
    %215 = memref.load %arg2[%c26] : memref<98xf32, #tpu.memory_space<smem>>
    %216 = vector.broadcast %215 : f32 to vector<16x16xf32>
    %217 = arith.mulf %216, %214 : vector<16x16xf32>
    %218 = arith.addf %210, %217 : vector<16x16xf32>
    %c3_i32_104 = arith.constant 3 : i32
    %219 = arith.addi %1, %c3_i32_104 : i32
    %c0_105 = arith.constant 0 : index
    %c0_106 = arith.constant 0 : index
    %220 = arith.index_cast %219 : i32 to index
    %c6_107 = arith.constant 6 : index
    %221 = vector.load %arg3[%c0_105, %c0_106, %220, %c6_107] : memref<1x2x22x22xf32, #tpu.memory_space<vmem>>, vector<1x1x16x16xf32>
    %222 = vector.shape_cast %221 : vector<1x1x16x16xf32> to vector<16x16xf32>
    %c27 = arith.constant 27 : index
    %223 = memref.load %arg2[%c27] : memref<98xf32, #tpu.memory_space<smem>>
    %224 = vector.broadcast %223 : f32 to vector<16x16xf32>
    %225 = arith.mulf %224, %222 : vector<16x16xf32>
    %226 = arith.addf %218, %225 : vector<16x16xf32>
    %c4_i32 = arith.constant 4 : i32
    %227 = arith.addi %1, %c4_i32 : i32
    %c0_108 = arith.constant 0 : index
    %c0_109 = arith.constant 0 : index
    %228 = arith.index_cast %227 : i32 to index
    %c0_110 = arith.constant 0 : index
    %229 = vector.load %arg3[%c0_108, %c0_109, %228, %c0_110] : memref<1x2x22x22xf32, #tpu.memory_space<vmem>>, vector<1x1x16x16xf32>
    %230 = vector.shape_cast %229 : vector<1x1x16x16xf32> to vector<16x16xf32>
    %c28 = arith.constant 28 : index
    %231 = memref.load %arg2[%c28] : memref<98xf32, #tpu.memory_space<smem>>
    %232 = vector.broadcast %231 : f32 to vector<16x16xf32>
    %233 = arith.mulf %232, %230 : vector<16x16xf32>
    %234 = arith.addf %226, %233 : vector<16x16xf32>
    %c4_i32_111 = arith.constant 4 : i32
    %235 = arith.addi %1, %c4_i32_111 : i32
    %c0_112 = arith.constant 0 : index
    %c0_113 = arith.constant 0 : index
    %236 = arith.index_cast %235 : i32 to index
    %c1_114 = arith.constant 1 : index
    %237 = vector.load %arg3[%c0_112, %c0_113, %236, %c1_114] : memref<1x2x22x22xf32, #tpu.memory_space<vmem>>, vector<1x1x16x16xf32>
    %238 = vector.shape_cast %237 : vector<1x1x16x16xf32> to vector<16x16xf32>
    %c29 = arith.constant 29 : index
    %239 = memref.load %arg2[%c29] : memref<98xf32, #tpu.memory_space<smem>>
    %240 = vector.broadcast %239 : f32 to vector<16x16xf32>
    %241 = arith.mulf %240, %238 : vector<16x16xf32>
    %242 = arith.addf %234, %241 : vector<16x16xf32>
    %c4_i32_115 = arith.constant 4 : i32
    %243 = arith.addi %1, %c4_i32_115 : i32
    %c0_116 = arith.constant 0 : index
    %c0_117 = arith.constant 0 : index
    %244 = arith.index_cast %243 : i32 to index
    %c2_118 = arith.constant 2 : index
    %245 = vector.load %arg3[%c0_116, %c0_117, %244, %c2_118] : memref<1x2x22x22xf32, #tpu.memory_space<vmem>>, vector<1x1x16x16xf32>
    %246 = vector.shape_cast %245 : vector<1x1x16x16xf32> to vector<16x16xf32>
    %c30 = arith.constant 30 : index
    %247 = memref.load %arg2[%c30] : memref<98xf32, #tpu.memory_space<smem>>
    %248 = vector.broadcast %247 : f32 to vector<16x16xf32>
    %249 = arith.mulf %248, %246 : vector<16x16xf32>
    %250 = arith.addf %242, %249 : vector<16x16xf32>
    %c4_i32_119 = arith.constant 4 : i32
    %251 = arith.addi %1, %c4_i32_119 : i32
    %c0_120 = arith.constant 0 : index
    %c0_121 = arith.constant 0 : index
    %252 = arith.index_cast %251 : i32 to index
    %c3_122 = arith.constant 3 : index
    %253 = vector.load %arg3[%c0_120, %c0_121, %252, %c3_122] : memref<1x2x22x22xf32, #tpu.memory_space<vmem>>, vector<1x1x16x16xf32>
    %254 = vector.shape_cast %253 : vector<1x1x16x16xf32> to vector<16x16xf32>
    %c31 = arith.constant 31 : index
    %255 = memref.load %arg2[%c31] : memref<98xf32, #tpu.memory_space<smem>>
    %256 = vector.broadcast %255 : f32 to vector<16x16xf32>
    %257 = arith.mulf %256, %254 : vector<16x16xf32>
    %258 = arith.addf %250, %257 : vector<16x16xf32>
    %c4_i32_123 = arith.constant 4 : i32
    %259 = arith.addi %1, %c4_i32_123 : i32
    %c0_124 = arith.constant 0 : index
    %c0_125 = arith.constant 0 : index
    %260 = arith.index_cast %259 : i32 to index
    %c4_126 = arith.constant 4 : index
    %261 = vector.load %arg3[%c0_124, %c0_125, %260, %c4_126] : memref<1x2x22x22xf32, #tpu.memory_space<vmem>>, vector<1x1x16x16xf32>
    %262 = vector.shape_cast %261 : vector<1x1x16x16xf32> to vector<16x16xf32>
    %c32 = arith.constant 32 : index
    %263 = memref.load %arg2[%c32] : memref<98xf32, #tpu.memory_space<smem>>
    %264 = vector.broadcast %263 : f32 to vector<16x16xf32>
    %265 = arith.mulf %264, %262 : vector<16x16xf32>
    %266 = arith.addf %258, %265 : vector<16x16xf32>
    %c4_i32_127 = arith.constant 4 : i32
    %267 = arith.addi %1, %c4_i32_127 : i32
    %c0_128 = arith.constant 0 : index
    %c0_129 = arith.constant 0 : index
    %268 = arith.index_cast %267 : i32 to index
    %c5_130 = arith.constant 5 : index
    %269 = vector.load %arg3[%c0_128, %c0_129, %268, %c5_130] : memref<1x2x22x22xf32, #tpu.memory_space<vmem>>, vector<1x1x16x16xf32>
    %270 = vector.shape_cast %269 : vector<1x1x16x16xf32> to vector<16x16xf32>
    %c33 = arith.constant 33 : index
    %271 = memref.load %arg2[%c33] : memref<98xf32, #tpu.memory_space<smem>>
    %272 = vector.broadcast %271 : f32 to vector<16x16xf32>
    %273 = arith.mulf %272, %270 : vector<16x16xf32>
    %274 = arith.addf %266, %273 : vector<16x16xf32>
    %c4_i32_131 = arith.constant 4 : i32
    %275 = arith.addi %1, %c4_i32_131 : i32
    %c0_132 = arith.constant 0 : index
    %c0_133 = arith.constant 0 : index
    %276 = arith.index_cast %275 : i32 to index
    %c6_134 = arith.constant 6 : index
    %277 = vector.load %arg3[%c0_132, %c0_133, %276, %c6_134] : memref<1x2x22x22xf32, #tpu.memory_space<vmem>>, vector<1x1x16x16xf32>
    %278 = vector.shape_cast %277 : vector<1x1x16x16xf32> to vector<16x16xf32>
    %c34 = arith.constant 34 : index
    %279 = memref.load %arg2[%c34] : memref<98xf32, #tpu.memory_space<smem>>
    %280 = vector.broadcast %279 : f32 to vector<16x16xf32>
    %281 = arith.mulf %280, %278 : vector<16x16xf32>
    %282 = arith.addf %274, %281 : vector<16x16xf32>
    %c5_i32 = arith.constant 5 : i32
    %283 = arith.addi %1, %c5_i32 : i32
    %c0_135 = arith.constant 0 : index
    %c0_136 = arith.constant 0 : index
    %284 = arith.index_cast %283 : i32 to index
    %c0_137 = arith.constant 0 : index
    %285 = vector.load %arg3[%c0_135, %c0_136, %284, %c0_137] : memref<1x2x22x22xf32, #tpu.memory_space<vmem>>, vector<1x1x16x16xf32>
    %286 = vector.shape_cast %285 : vector<1x1x16x16xf32> to vector<16x16xf32>
    %c35 = arith.constant 35 : index
    %287 = memref.load %arg2[%c35] : memref<98xf32, #tpu.memory_space<smem>>
    %288 = vector.broadcast %287 : f32 to vector<16x16xf32>
    %289 = arith.mulf %288, %286 : vector<16x16xf32>
    %290 = arith.addf %282, %289 : vector<16x16xf32>
    %c5_i32_138 = arith.constant 5 : i32
    %291 = arith.addi %1, %c5_i32_138 : i32
    %c0_139 = arith.constant 0 : index
    %c0_140 = arith.constant 0 : index
    %292 = arith.index_cast %291 : i32 to index
    %c1_141 = arith.constant 1 : index
    %293 = vector.load %arg3[%c0_139, %c0_140, %292, %c1_141] : memref<1x2x22x22xf32, #tpu.memory_space<vmem>>, vector<1x1x16x16xf32>
    %294 = vector.shape_cast %293 : vector<1x1x16x16xf32> to vector<16x16xf32>
    %c36 = arith.constant 36 : index
    %295 = memref.load %arg2[%c36] : memref<98xf32, #tpu.memory_space<smem>>
    %296 = vector.broadcast %295 : f32 to vector<16x16xf32>
    %297 = arith.mulf %296, %294 : vector<16x16xf32>
    %298 = arith.addf %290, %297 : vector<16x16xf32>
    %c5_i32_142 = arith.constant 5 : i32
    %299 = arith.addi %1, %c5_i32_142 : i32
    %c0_143 = arith.constant 0 : index
    %c0_144 = arith.constant 0 : index
    %300 = arith.index_cast %299 : i32 to index
    %c2_145 = arith.constant 2 : index
    %301 = vector.load %arg3[%c0_143, %c0_144, %300, %c2_145] : memref<1x2x22x22xf32, #tpu.memory_space<vmem>>, vector<1x1x16x16xf32>
    %302 = vector.shape_cast %301 : vector<1x1x16x16xf32> to vector<16x16xf32>
    %c37 = arith.constant 37 : index
    %303 = memref.load %arg2[%c37] : memref<98xf32, #tpu.memory_space<smem>>
    %304 = vector.broadcast %303 : f32 to vector<16x16xf32>
    %305 = arith.mulf %304, %302 : vector<16x16xf32>
    %306 = arith.addf %298, %305 : vector<16x16xf32>
    %c5_i32_146 = arith.constant 5 : i32
    %307 = arith.addi %1, %c5_i32_146 : i32
    %c0_147 = arith.constant 0 : index
    %c0_148 = arith.constant 0 : index
    %308 = arith.index_cast %307 : i32 to index
    %c3_149 = arith.constant 3 : index
    %309 = vector.load %arg3[%c0_147, %c0_148, %308, %c3_149] : memref<1x2x22x22xf32, #tpu.memory_space<vmem>>, vector<1x1x16x16xf32>
    %310 = vector.shape_cast %309 : vector<1x1x16x16xf32> to vector<16x16xf32>
    %c38 = arith.constant 38 : index
    %311 = memref.load %arg2[%c38] : memref<98xf32, #tpu.memory_space<smem>>
    %312 = vector.broadcast %311 : f32 to vector<16x16xf32>
    %313 = arith.mulf %312, %310 : vector<16x16xf32>
    %314 = arith.addf %306, %313 : vector<16x16xf32>
    %c5_i32_150 = arith.constant 5 : i32
    %315 = arith.addi %1, %c5_i32_150 : i32
    %c0_151 = arith.constant 0 : index
    %c0_152 = arith.constant 0 : index
    %316 = arith.index_cast %315 : i32 to index
    %c4_153 = arith.constant 4 : index
    %317 = vector.load %arg3[%c0_151, %c0_152, %316, %c4_153] : memref<1x2x22x22xf32, #tpu.memory_space<vmem>>, vector<1x1x16x16xf32>
    %318 = vector.shape_cast %317 : vector<1x1x16x16xf32> to vector<16x16xf32>
    %c39 = arith.constant 39 : index
    %319 = memref.load %arg2[%c39] : memref<98xf32, #tpu.memory_space<smem>>
    %320 = vector.broadcast %319 : f32 to vector<16x16xf32>
    %321 = arith.mulf %320, %318 : vector<16x16xf32>
    %322 = arith.addf %314, %321 : vector<16x16xf32>
    %c5_i32_154 = arith.constant 5 : i32
    %323 = arith.addi %1, %c5_i32_154 : i32
    %c0_155 = arith.constant 0 : index
    %c0_156 = arith.constant 0 : index
    %324 = arith.index_cast %323 : i32 to index
    %c5_157 = arith.constant 5 : index
    %325 = vector.load %arg3[%c0_155, %c0_156, %324, %c5_157] : memref<1x2x22x22xf32, #tpu.memory_space<vmem>>, vector<1x1x16x16xf32>
    %326 = vector.shape_cast %325 : vector<1x1x16x16xf32> to vector<16x16xf32>
    %c40 = arith.constant 40 : index
    %327 = memref.load %arg2[%c40] : memref<98xf32, #tpu.memory_space<smem>>
    %328 = vector.broadcast %327 : f32 to vector<16x16xf32>
    %329 = arith.mulf %328, %326 : vector<16x16xf32>
    %330 = arith.addf %322, %329 : vector<16x16xf32>
    %c5_i32_158 = arith.constant 5 : i32
    %331 = arith.addi %1, %c5_i32_158 : i32
    %c0_159 = arith.constant 0 : index
    %c0_160 = arith.constant 0 : index
    %332 = arith.index_cast %331 : i32 to index
    %c6_161 = arith.constant 6 : index
    %333 = vector.load %arg3[%c0_159, %c0_160, %332, %c6_161] : memref<1x2x22x22xf32, #tpu.memory_space<vmem>>, vector<1x1x16x16xf32>
    %334 = vector.shape_cast %333 : vector<1x1x16x16xf32> to vector<16x16xf32>
    %c41 = arith.constant 41 : index
    %335 = memref.load %arg2[%c41] : memref<98xf32, #tpu.memory_space<smem>>
    %336 = vector.broadcast %335 : f32 to vector<16x16xf32>
    %337 = arith.mulf %336, %334 : vector<16x16xf32>
    %338 = arith.addf %330, %337 : vector<16x16xf32>
    %c6_i32 = arith.constant 6 : i32
    %339 = arith.addi %1, %c6_i32 : i32
    %c0_162 = arith.constant 0 : index
    %c0_163 = arith.constant 0 : index
    %340 = arith.index_cast %339 : i32 to index
    %c0_164 = arith.constant 0 : index
    %341 = vector.load %arg3[%c0_162, %c0_163, %340, %c0_164] : memref<1x2x22x22xf32, #tpu.memory_space<vmem>>, vector<1x1x16x16xf32>
    %342 = vector.shape_cast %341 : vector<1x1x16x16xf32> to vector<16x16xf32>
    %c42 = arith.constant 42 : index
    %343 = memref.load %arg2[%c42] : memref<98xf32, #tpu.memory_space<smem>>
    %344 = vector.broadcast %343 : f32 to vector<16x16xf32>
    %345 = arith.mulf %344, %342 : vector<16x16xf32>
    %346 = arith.addf %338, %345 : vector<16x16xf32>
    %c6_i32_165 = arith.constant 6 : i32
    %347 = arith.addi %1, %c6_i32_165 : i32
    %c0_166 = arith.constant 0 : index
    %c0_167 = arith.constant 0 : index
    %348 = arith.index_cast %347 : i32 to index
    %c1_168 = arith.constant 1 : index
    %349 = vector.load %arg3[%c0_166, %c0_167, %348, %c1_168] : memref<1x2x22x22xf32, #tpu.memory_space<vmem>>, vector<1x1x16x16xf32>
    %350 = vector.shape_cast %349 : vector<1x1x16x16xf32> to vector<16x16xf32>
    %c43 = arith.constant 43 : index
    %351 = memref.load %arg2[%c43] : memref<98xf32, #tpu.memory_space<smem>>
    %352 = vector.broadcast %351 : f32 to vector<16x16xf32>
    %353 = arith.mulf %352, %350 : vector<16x16xf32>
    %354 = arith.addf %346, %353 : vector<16x16xf32>
    %c6_i32_169 = arith.constant 6 : i32
    %355 = arith.addi %1, %c6_i32_169 : i32
    %c0_170 = arith.constant 0 : index
    %c0_171 = arith.constant 0 : index
    %356 = arith.index_cast %355 : i32 to index
    %c2_172 = arith.constant 2 : index
    %357 = vector.load %arg3[%c0_170, %c0_171, %356, %c2_172] : memref<1x2x22x22xf32, #tpu.memory_space<vmem>>, vector<1x1x16x16xf32>
    %358 = vector.shape_cast %357 : vector<1x1x16x16xf32> to vector<16x16xf32>
    %c44 = arith.constant 44 : index
    %359 = memref.load %arg2[%c44] : memref<98xf32, #tpu.memory_space<smem>>
    %360 = vector.broadcast %359 : f32 to vector<16x16xf32>
    %361 = arith.mulf %360, %358 : vector<16x16xf32>
    %362 = arith.addf %354, %361 : vector<16x16xf32>
    %c6_i32_173 = arith.constant 6 : i32
    %363 = arith.addi %1, %c6_i32_173 : i32
    %c0_174 = arith.constant 0 : index
    %c0_175 = arith.constant 0 : index
    %364 = arith.index_cast %363 : i32 to index
    %c3_176 = arith.constant 3 : index
    %365 = vector.load %arg3[%c0_174, %c0_175, %364, %c3_176] : memref<1x2x22x22xf32, #tpu.memory_space<vmem>>, vector<1x1x16x16xf32>
    %366 = vector.shape_cast %365 : vector<1x1x16x16xf32> to vector<16x16xf32>
    %c45 = arith.constant 45 : index
    %367 = memref.load %arg2[%c45] : memref<98xf32, #tpu.memory_space<smem>>
    %368 = vector.broadcast %367 : f32 to vector<16x16xf32>
    %369 = arith.mulf %368, %366 : vector<16x16xf32>
    %370 = arith.addf %362, %369 : vector<16x16xf32>
    %c6_i32_177 = arith.constant 6 : i32
    %371 = arith.addi %1, %c6_i32_177 : i32
    %c0_178 = arith.constant 0 : index
    %c0_179 = arith.constant 0 : index
    %372 = arith.index_cast %371 : i32 to index
    %c4_180 = arith.constant 4 : index
    %373 = vector.load %arg3[%c0_178, %c0_179, %372, %c4_180] : memref<1x2x22x22xf32, #tpu.memory_space<vmem>>, vector<1x1x16x16xf32>
    %374 = vector.shape_cast %373 : vector<1x1x16x16xf32> to vector<16x16xf32>
    %c46 = arith.constant 46 : index
    %375 = memref.load %arg2[%c46] : memref<98xf32, #tpu.memory_space<smem>>
    %376 = vector.broadcast %375 : f32 to vector<16x16xf32>
    %377 = arith.mulf %376, %374 : vector<16x16xf32>
    %378 = arith.addf %370, %377 : vector<16x16xf32>
    %c6_i32_181 = arith.constant 6 : i32
    %379 = arith.addi %1, %c6_i32_181 : i32
    %c0_182 = arith.constant 0 : index
    %c0_183 = arith.constant 0 : index
    %380 = arith.index_cast %379 : i32 to index
    %c5_184 = arith.constant 5 : index
    %381 = vector.load %arg3[%c0_182, %c0_183, %380, %c5_184] : memref<1x2x22x22xf32, #tpu.memory_space<vmem>>, vector<1x1x16x16xf32>
    %382 = vector.shape_cast %381 : vector<1x1x16x16xf32> to vector<16x16xf32>
    %c47 = arith.constant 47 : index
    %383 = memref.load %arg2[%c47] : memref<98xf32, #tpu.memory_space<smem>>
    %384 = vector.broadcast %383 : f32 to vector<16x16xf32>
    %385 = arith.mulf %384, %382 : vector<16x16xf32>
    %386 = arith.addf %378, %385 : vector<16x16xf32>
    %c6_i32_185 = arith.constant 6 : i32
    %387 = arith.addi %1, %c6_i32_185 : i32
    %c0_186 = arith.constant 0 : index
    %c0_187 = arith.constant 0 : index
    %388 = arith.index_cast %387 : i32 to index
    %c6_188 = arith.constant 6 : index
    %389 = vector.load %arg3[%c0_186, %c0_187, %388, %c6_188] : memref<1x2x22x22xf32, #tpu.memory_space<vmem>>, vector<1x1x16x16xf32>
    %390 = vector.shape_cast %389 : vector<1x1x16x16xf32> to vector<16x16xf32>
    %c48 = arith.constant 48 : index
    %391 = memref.load %arg2[%c48] : memref<98xf32, #tpu.memory_space<smem>>
    %392 = vector.broadcast %391 : f32 to vector<16x16xf32>
    %393 = arith.mulf %392, %390 : vector<16x16xf32>
    %394 = arith.addf %386, %393 : vector<16x16xf32>
    %c0_i32_189 = arith.constant 0 : i32
    %395 = arith.addi %1, %c0_i32_189 : i32
    %c0_190 = arith.constant 0 : index
    %c1_191 = arith.constant 1 : index
    %396 = arith.index_cast %395 : i32 to index
    %c0_192 = arith.constant 0 : index
    %397 = vector.load %arg3[%c0_190, %c1_191, %396, %c0_192] : memref<1x2x22x22xf32, #tpu.memory_space<vmem>>, vector<1x1x16x16xf32>
    %398 = vector.shape_cast %397 : vector<1x1x16x16xf32> to vector<16x16xf32>
    %c49 = arith.constant 49 : index
    %399 = memref.load %arg2[%c49] : memref<98xf32, #tpu.memory_space<smem>>
    %400 = vector.broadcast %399 : f32 to vector<16x16xf32>
    %401 = arith.mulf %400, %398 : vector<16x16xf32>
    %402 = arith.addf %394, %401 : vector<16x16xf32>
    %c0_i32_193 = arith.constant 0 : i32
    %403 = arith.addi %1, %c0_i32_193 : i32
    %c0_194 = arith.constant 0 : index
    %c1_195 = arith.constant 1 : index
    %404 = arith.index_cast %403 : i32 to index
    %c1_196 = arith.constant 1 : index
    %405 = vector.load %arg3[%c0_194, %c1_195, %404, %c1_196] : memref<1x2x22x22xf32, #tpu.memory_space<vmem>>, vector<1x1x16x16xf32>
    %406 = vector.shape_cast %405 : vector<1x1x16x16xf32> to vector<16x16xf32>
    %c50 = arith.constant 50 : index
    %407 = memref.load %arg2[%c50] : memref<98xf32, #tpu.memory_space<smem>>
    %408 = vector.broadcast %407 : f32 to vector<16x16xf32>
    %409 = arith.mulf %408, %406 : vector<16x16xf32>
    %410 = arith.addf %402, %409 : vector<16x16xf32>
    %c0_i32_197 = arith.constant 0 : i32
    %411 = arith.addi %1, %c0_i32_197 : i32
    %c0_198 = arith.constant 0 : index
    %c1_199 = arith.constant 1 : index
    %412 = arith.index_cast %411 : i32 to index
    %c2_200 = arith.constant 2 : index
    %413 = vector.load %arg3[%c0_198, %c1_199, %412, %c2_200] : memref<1x2x22x22xf32, #tpu.memory_space<vmem>>, vector<1x1x16x16xf32>
    %414 = vector.shape_cast %413 : vector<1x1x16x16xf32> to vector<16x16xf32>
    %c51 = arith.constant 51 : index
    %415 = memref.load %arg2[%c51] : memref<98xf32, #tpu.memory_space<smem>>
    %416 = vector.broadcast %415 : f32 to vector<16x16xf32>
    %417 = arith.mulf %416, %414 : vector<16x16xf32>
    %418 = arith.addf %410, %417 : vector<16x16xf32>
    %c0_i32_201 = arith.constant 0 : i32
    %419 = arith.addi %1, %c0_i32_201 : i32
    %c0_202 = arith.constant 0 : index
    %c1_203 = arith.constant 1 : index
    %420 = arith.index_cast %419 : i32 to index
    %c3_204 = arith.constant 3 : index
    %421 = vector.load %arg3[%c0_202, %c1_203, %420, %c3_204] : memref<1x2x22x22xf32, #tpu.memory_space<vmem>>, vector<1x1x16x16xf32>
    %422 = vector.shape_cast %421 : vector<1x1x16x16xf32> to vector<16x16xf32>
    %c52 = arith.constant 52 : index
    %423 = memref.load %arg2[%c52] : memref<98xf32, #tpu.memory_space<smem>>
    %424 = vector.broadcast %423 : f32 to vector<16x16xf32>
    %425 = arith.mulf %424, %422 : vector<16x16xf32>
    %426 = arith.addf %418, %425 : vector<16x16xf32>
    %c0_i32_205 = arith.constant 0 : i32
    %427 = arith.addi %1, %c0_i32_205 : i32
    %c0_206 = arith.constant 0 : index
    %c1_207 = arith.constant 1 : index
    %428 = arith.index_cast %427 : i32 to index
    %c4_208 = arith.constant 4 : index
    %429 = vector.load %arg3[%c0_206, %c1_207, %428, %c4_208] : memref<1x2x22x22xf32, #tpu.memory_space<vmem>>, vector<1x1x16x16xf32>
    %430 = vector.shape_cast %429 : vector<1x1x16x16xf32> to vector<16x16xf32>
    %c53 = arith.constant 53 : index
    %431 = memref.load %arg2[%c53] : memref<98xf32, #tpu.memory_space<smem>>
    %432 = vector.broadcast %431 : f32 to vector<16x16xf32>
    %433 = arith.mulf %432, %430 : vector<16x16xf32>
    %434 = arith.addf %426, %433 : vector<16x16xf32>
    %c0_i32_209 = arith.constant 0 : i32
    %435 = arith.addi %1, %c0_i32_209 : i32
    %c0_210 = arith.constant 0 : index
    %c1_211 = arith.constant 1 : index
    %436 = arith.index_cast %435 : i32 to index
    %c5_212 = arith.constant 5 : index
    %437 = vector.load %arg3[%c0_210, %c1_211, %436, %c5_212] : memref<1x2x22x22xf32, #tpu.memory_space<vmem>>, vector<1x1x16x16xf32>
    %438 = vector.shape_cast %437 : vector<1x1x16x16xf32> to vector<16x16xf32>
    %c54 = arith.constant 54 : index
    %439 = memref.load %arg2[%c54] : memref<98xf32, #tpu.memory_space<smem>>
    %440 = vector.broadcast %439 : f32 to vector<16x16xf32>
    %441 = arith.mulf %440, %438 : vector<16x16xf32>
    %442 = arith.addf %434, %441 : vector<16x16xf32>
    %c0_i32_213 = arith.constant 0 : i32
    %443 = arith.addi %1, %c0_i32_213 : i32
    %c0_214 = arith.constant 0 : index
    %c1_215 = arith.constant 1 : index
    %444 = arith.index_cast %443 : i32 to index
    %c6_216 = arith.constant 6 : index
    %445 = vector.load %arg3[%c0_214, %c1_215, %444, %c6_216] : memref<1x2x22x22xf32, #tpu.memory_space<vmem>>, vector<1x1x16x16xf32>
    %446 = vector.shape_cast %445 : vector<1x1x16x16xf32> to vector<16x16xf32>
    %c55 = arith.constant 55 : index
    %447 = memref.load %arg2[%c55] : memref<98xf32, #tpu.memory_space<smem>>
    %448 = vector.broadcast %447 : f32 to vector<16x16xf32>
    %449 = arith.mulf %448, %446 : vector<16x16xf32>
    %450 = arith.addf %442, %449 : vector<16x16xf32>
    %c1_i32_217 = arith.constant 1 : i32
    %451 = arith.addi %1, %c1_i32_217 : i32
    %c0_218 = arith.constant 0 : index
    %c1_219 = arith.constant 1 : index
    %452 = arith.index_cast %451 : i32 to index
    %c0_220 = arith.constant 0 : index
    %453 = vector.load %arg3[%c0_218, %c1_219, %452, %c0_220] : memref<1x2x22x22xf32, #tpu.memory_space<vmem>>, vector<1x1x16x16xf32>
    %454 = vector.shape_cast %453 : vector<1x1x16x16xf32> to vector<16x16xf32>
    %c56 = arith.constant 56 : index
    %455 = memref.load %arg2[%c56] : memref<98xf32, #tpu.memory_space<smem>>
    %456 = vector.broadcast %455 : f32 to vector<16x16xf32>
    %457 = arith.mulf %456, %454 : vector<16x16xf32>
    %458 = arith.addf %450, %457 : vector<16x16xf32>
    %c1_i32_221 = arith.constant 1 : i32
    %459 = arith.addi %1, %c1_i32_221 : i32
    %c0_222 = arith.constant 0 : index
    %c1_223 = arith.constant 1 : index
    %460 = arith.index_cast %459 : i32 to index
    %c1_224 = arith.constant 1 : index
    %461 = vector.load %arg3[%c0_222, %c1_223, %460, %c1_224] : memref<1x2x22x22xf32, #tpu.memory_space<vmem>>, vector<1x1x16x16xf32>
    %462 = vector.shape_cast %461 : vector<1x1x16x16xf32> to vector<16x16xf32>
    %c57 = arith.constant 57 : index
    %463 = memref.load %arg2[%c57] : memref<98xf32, #tpu.memory_space<smem>>
    %464 = vector.broadcast %463 : f32 to vector<16x16xf32>
    %465 = arith.mulf %464, %462 : vector<16x16xf32>
    %466 = arith.addf %458, %465 : vector<16x16xf32>
    %c1_i32_225 = arith.constant 1 : i32
    %467 = arith.addi %1, %c1_i32_225 : i32
    %c0_226 = arith.constant 0 : index
    %c1_227 = arith.constant 1 : index
    %468 = arith.index_cast %467 : i32 to index
    %c2_228 = arith.constant 2 : index
    %469 = vector.load %arg3[%c0_226, %c1_227, %468, %c2_228] : memref<1x2x22x22xf32, #tpu.memory_space<vmem>>, vector<1x1x16x16xf32>
    %470 = vector.shape_cast %469 : vector<1x1x16x16xf32> to vector<16x16xf32>
    %c58 = arith.constant 58 : index
    %471 = memref.load %arg2[%c58] : memref<98xf32, #tpu.memory_space<smem>>
    %472 = vector.broadcast %471 : f32 to vector<16x16xf32>
    %473 = arith.mulf %472, %470 : vector<16x16xf32>
    %474 = arith.addf %466, %473 : vector<16x16xf32>
    %c1_i32_229 = arith.constant 1 : i32
    %475 = arith.addi %1, %c1_i32_229 : i32
    %c0_230 = arith.constant 0 : index
    %c1_231 = arith.constant 1 : index
    %476 = arith.index_cast %475 : i32 to index
    %c3_232 = arith.constant 3 : index
    %477 = vector.load %arg3[%c0_230, %c1_231, %476, %c3_232] : memref<1x2x22x22xf32, #tpu.memory_space<vmem>>, vector<1x1x16x16xf32>
    %478 = vector.shape_cast %477 : vector<1x1x16x16xf32> to vector<16x16xf32>
    %c59 = arith.constant 59 : index
    %479 = memref.load %arg2[%c59] : memref<98xf32, #tpu.memory_space<smem>>
    %480 = vector.broadcast %479 : f32 to vector<16x16xf32>
    %481 = arith.mulf %480, %478 : vector<16x16xf32>
    %482 = arith.addf %474, %481 : vector<16x16xf32>
    %c1_i32_233 = arith.constant 1 : i32
    %483 = arith.addi %1, %c1_i32_233 : i32
    %c0_234 = arith.constant 0 : index
    %c1_235 = arith.constant 1 : index
    %484 = arith.index_cast %483 : i32 to index
    %c4_236 = arith.constant 4 : index
    %485 = vector.load %arg3[%c0_234, %c1_235, %484, %c4_236] : memref<1x2x22x22xf32, #tpu.memory_space<vmem>>, vector<1x1x16x16xf32>
    %486 = vector.shape_cast %485 : vector<1x1x16x16xf32> to vector<16x16xf32>
    %c60 = arith.constant 60 : index
    %487 = memref.load %arg2[%c60] : memref<98xf32, #tpu.memory_space<smem>>
    %488 = vector.broadcast %487 : f32 to vector<16x16xf32>
    %489 = arith.mulf %488, %486 : vector<16x16xf32>
    %490 = arith.addf %482, %489 : vector<16x16xf32>
    %c1_i32_237 = arith.constant 1 : i32
    %491 = arith.addi %1, %c1_i32_237 : i32
    %c0_238 = arith.constant 0 : index
    %c1_239 = arith.constant 1 : index
    %492 = arith.index_cast %491 : i32 to index
    %c5_240 = arith.constant 5 : index
    %493 = vector.load %arg3[%c0_238, %c1_239, %492, %c5_240] : memref<1x2x22x22xf32, #tpu.memory_space<vmem>>, vector<1x1x16x16xf32>
    %494 = vector.shape_cast %493 : vector<1x1x16x16xf32> to vector<16x16xf32>
    %c61 = arith.constant 61 : index
    %495 = memref.load %arg2[%c61] : memref<98xf32, #tpu.memory_space<smem>>
    %496 = vector.broadcast %495 : f32 to vector<16x16xf32>
    %497 = arith.mulf %496, %494 : vector<16x16xf32>
    %498 = arith.addf %490, %497 : vector<16x16xf32>
    %c1_i32_241 = arith.constant 1 : i32
    %499 = arith.addi %1, %c1_i32_241 : i32
    %c0_242 = arith.constant 0 : index
    %c1_243 = arith.constant 1 : index
    %500 = arith.index_cast %499 : i32 to index
    %c6_244 = arith.constant 6 : index
    %501 = vector.load %arg3[%c0_242, %c1_243, %500, %c6_244] : memref<1x2x22x22xf32, #tpu.memory_space<vmem>>, vector<1x1x16x16xf32>
    %502 = vector.shape_cast %501 : vector<1x1x16x16xf32> to vector<16x16xf32>
    %c62 = arith.constant 62 : index
    %503 = memref.load %arg2[%c62] : memref<98xf32, #tpu.memory_space<smem>>
    %504 = vector.broadcast %503 : f32 to vector<16x16xf32>
    %505 = arith.mulf %504, %502 : vector<16x16xf32>
    %506 = arith.addf %498, %505 : vector<16x16xf32>
    %c2_i32_245 = arith.constant 2 : i32
    %507 = arith.addi %1, %c2_i32_245 : i32
    %c0_246 = arith.constant 0 : index
    %c1_247 = arith.constant 1 : index
    %508 = arith.index_cast %507 : i32 to index
    %c0_248 = arith.constant 0 : index
    %509 = vector.load %arg3[%c0_246, %c1_247, %508, %c0_248] : memref<1x2x22x22xf32, #tpu.memory_space<vmem>>, vector<1x1x16x16xf32>
    %510 = vector.shape_cast %509 : vector<1x1x16x16xf32> to vector<16x16xf32>
    %c63 = arith.constant 63 : index
    %511 = memref.load %arg2[%c63] : memref<98xf32, #tpu.memory_space<smem>>
    %512 = vector.broadcast %511 : f32 to vector<16x16xf32>
    %513 = arith.mulf %512, %510 : vector<16x16xf32>
    %514 = arith.addf %506, %513 : vector<16x16xf32>
    %c2_i32_249 = arith.constant 2 : i32
    %515 = arith.addi %1, %c2_i32_249 : i32
    %c0_250 = arith.constant 0 : index
    %c1_251 = arith.constant 1 : index
    %516 = arith.index_cast %515 : i32 to index
    %c1_252 = arith.constant 1 : index
    %517 = vector.load %arg3[%c0_250, %c1_251, %516, %c1_252] : memref<1x2x22x22xf32, #tpu.memory_space<vmem>>, vector<1x1x16x16xf32>
    %518 = vector.shape_cast %517 : vector<1x1x16x16xf32> to vector<16x16xf32>
    %c64 = arith.constant 64 : index
    %519 = memref.load %arg2[%c64] : memref<98xf32, #tpu.memory_space<smem>>
    %520 = vector.broadcast %519 : f32 to vector<16x16xf32>
    %521 = arith.mulf %520, %518 : vector<16x16xf32>
    %522 = arith.addf %514, %521 : vector<16x16xf32>
    %c2_i32_253 = arith.constant 2 : i32
    %523 = arith.addi %1, %c2_i32_253 : i32
    %c0_254 = arith.constant 0 : index
    %c1_255 = arith.constant 1 : index
    %524 = arith.index_cast %523 : i32 to index
    %c2_256 = arith.constant 2 : index
    %525 = vector.load %arg3[%c0_254, %c1_255, %524, %c2_256] : memref<1x2x22x22xf32, #tpu.memory_space<vmem>>, vector<1x1x16x16xf32>
    %526 = vector.shape_cast %525 : vector<1x1x16x16xf32> to vector<16x16xf32>
    %c65 = arith.constant 65 : index
    %527 = memref.load %arg2[%c65] : memref<98xf32, #tpu.memory_space<smem>>
    %528 = vector.broadcast %527 : f32 to vector<16x16xf32>
    %529 = arith.mulf %528, %526 : vector<16x16xf32>
    %530 = arith.addf %522, %529 : vector<16x16xf32>
    %c2_i32_257 = arith.constant 2 : i32
    %531 = arith.addi %1, %c2_i32_257 : i32
    %c0_258 = arith.constant 0 : index
    %c1_259 = arith.constant 1 : index
    %532 = arith.index_cast %531 : i32 to index
    %c3_260 = arith.constant 3 : index
    %533 = vector.load %arg3[%c0_258, %c1_259, %532, %c3_260] : memref<1x2x22x22xf32, #tpu.memory_space<vmem>>, vector<1x1x16x16xf32>
    %534 = vector.shape_cast %533 : vector<1x1x16x16xf32> to vector<16x16xf32>
    %c66 = arith.constant 66 : index
    %535 = memref.load %arg2[%c66] : memref<98xf32, #tpu.memory_space<smem>>
    %536 = vector.broadcast %535 : f32 to vector<16x16xf32>
    %537 = arith.mulf %536, %534 : vector<16x16xf32>
    %538 = arith.addf %530, %537 : vector<16x16xf32>
    %c2_i32_261 = arith.constant 2 : i32
    %539 = arith.addi %1, %c2_i32_261 : i32
    %c0_262 = arith.constant 0 : index
    %c1_263 = arith.constant 1 : index
    %540 = arith.index_cast %539 : i32 to index
    %c4_264 = arith.constant 4 : index
    %541 = vector.load %arg3[%c0_262, %c1_263, %540, %c4_264] : memref<1x2x22x22xf32, #tpu.memory_space<vmem>>, vector<1x1x16x16xf32>
    %542 = vector.shape_cast %541 : vector<1x1x16x16xf32> to vector<16x16xf32>
    %c67 = arith.constant 67 : index
    %543 = memref.load %arg2[%c67] : memref<98xf32, #tpu.memory_space<smem>>
    %544 = vector.broadcast %543 : f32 to vector<16x16xf32>
    %545 = arith.mulf %544, %542 : vector<16x16xf32>
    %546 = arith.addf %538, %545 : vector<16x16xf32>
    %c2_i32_265 = arith.constant 2 : i32
    %547 = arith.addi %1, %c2_i32_265 : i32
    %c0_266 = arith.constant 0 : index
    %c1_267 = arith.constant 1 : index
    %548 = arith.index_cast %547 : i32 to index
    %c5_268 = arith.constant 5 : index
    %549 = vector.load %arg3[%c0_266, %c1_267, %548, %c5_268] : memref<1x2x22x22xf32, #tpu.memory_space<vmem>>, vector<1x1x16x16xf32>
    %550 = vector.shape_cast %549 : vector<1x1x16x16xf32> to vector<16x16xf32>
    %c68 = arith.constant 68 : index
    %551 = memref.load %arg2[%c68] : memref<98xf32, #tpu.memory_space<smem>>
    %552 = vector.broadcast %551 : f32 to vector<16x16xf32>
    %553 = arith.mulf %552, %550 : vector<16x16xf32>
    %554 = arith.addf %546, %553 : vector<16x16xf32>
    %c2_i32_269 = arith.constant 2 : i32
    %555 = arith.addi %1, %c2_i32_269 : i32
    %c0_270 = arith.constant 0 : index
    %c1_271 = arith.constant 1 : index
    %556 = arith.index_cast %555 : i32 to index
    %c6_272 = arith.constant 6 : index
    %557 = vector.load %arg3[%c0_270, %c1_271, %556, %c6_272] : memref<1x2x22x22xf32, #tpu.memory_space<vmem>>, vector<1x1x16x16xf32>
    %558 = vector.shape_cast %557 : vector<1x1x16x16xf32> to vector<16x16xf32>
    %c69 = arith.constant 69 : index
    %559 = memref.load %arg2[%c69] : memref<98xf32, #tpu.memory_space<smem>>
    %560 = vector.broadcast %559 : f32 to vector<16x16xf32>
    %561 = arith.mulf %560, %558 : vector<16x16xf32>
    %562 = arith.addf %554, %561 : vector<16x16xf32>
    %c3_i32_273 = arith.constant 3 : i32
    %563 = arith.addi %1, %c3_i32_273 : i32
    %c0_274 = arith.constant 0 : index
    %c1_275 = arith.constant 1 : index
    %564 = arith.index_cast %563 : i32 to index
    %c0_276 = arith.constant 0 : index
    %565 = vector.load %arg3[%c0_274, %c1_275, %564, %c0_276] : memref<1x2x22x22xf32, #tpu.memory_space<vmem>>, vector<1x1x16x16xf32>
    %566 = vector.shape_cast %565 : vector<1x1x16x16xf32> to vector<16x16xf32>
    %c70 = arith.constant 70 : index
    %567 = memref.load %arg2[%c70] : memref<98xf32, #tpu.memory_space<smem>>
    %568 = vector.broadcast %567 : f32 to vector<16x16xf32>
    %569 = arith.mulf %568, %566 : vector<16x16xf32>
    %570 = arith.addf %562, %569 : vector<16x16xf32>
    %c3_i32_277 = arith.constant 3 : i32
    %571 = arith.addi %1, %c3_i32_277 : i32
    %c0_278 = arith.constant 0 : index
    %c1_279 = arith.constant 1 : index
    %572 = arith.index_cast %571 : i32 to index
    %c1_280 = arith.constant 1 : index
    %573 = vector.load %arg3[%c0_278, %c1_279, %572, %c1_280] : memref<1x2x22x22xf32, #tpu.memory_space<vmem>>, vector<1x1x16x16xf32>
    %574 = vector.shape_cast %573 : vector<1x1x16x16xf32> to vector<16x16xf32>
    %c71 = arith.constant 71 : index
    %575 = memref.load %arg2[%c71] : memref<98xf32, #tpu.memory_space<smem>>
    %576 = vector.broadcast %575 : f32 to vector<16x16xf32>
    %577 = arith.mulf %576, %574 : vector<16x16xf32>
    %578 = arith.addf %570, %577 : vector<16x16xf32>
    %c3_i32_281 = arith.constant 3 : i32
    %579 = arith.addi %1, %c3_i32_281 : i32
    %c0_282 = arith.constant 0 : index
    %c1_283 = arith.constant 1 : index
    %580 = arith.index_cast %579 : i32 to index
    %c2_284 = arith.constant 2 : index
    %581 = vector.load %arg3[%c0_282, %c1_283, %580, %c2_284] : memref<1x2x22x22xf32, #tpu.memory_space<vmem>>, vector<1x1x16x16xf32>
    %582 = vector.shape_cast %581 : vector<1x1x16x16xf32> to vector<16x16xf32>
    %c72 = arith.constant 72 : index
    %583 = memref.load %arg2[%c72] : memref<98xf32, #tpu.memory_space<smem>>
    %584 = vector.broadcast %583 : f32 to vector<16x16xf32>
    %585 = arith.mulf %584, %582 : vector<16x16xf32>
    %586 = arith.addf %578, %585 : vector<16x16xf32>
    %c3_i32_285 = arith.constant 3 : i32
    %587 = arith.addi %1, %c3_i32_285 : i32
    %c0_286 = arith.constant 0 : index
    %c1_287 = arith.constant 1 : index
    %588 = arith.index_cast %587 : i32 to index
    %c3_288 = arith.constant 3 : index
    %589 = vector.load %arg3[%c0_286, %c1_287, %588, %c3_288] : memref<1x2x22x22xf32, #tpu.memory_space<vmem>>, vector<1x1x16x16xf32>
    %590 = vector.shape_cast %589 : vector<1x1x16x16xf32> to vector<16x16xf32>
    %c73 = arith.constant 73 : index
    %591 = memref.load %arg2[%c73] : memref<98xf32, #tpu.memory_space<smem>>
    %592 = vector.broadcast %591 : f32 to vector<16x16xf32>
    %593 = arith.mulf %592, %590 : vector<16x16xf32>
    %594 = arith.addf %586, %593 : vector<16x16xf32>
    %c3_i32_289 = arith.constant 3 : i32
    %595 = arith.addi %1, %c3_i32_289 : i32
    %c0_290 = arith.constant 0 : index
    %c1_291 = arith.constant 1 : index
    %596 = arith.index_cast %595 : i32 to index
    %c4_292 = arith.constant 4 : index
    %597 = vector.load %arg3[%c0_290, %c1_291, %596, %c4_292] : memref<1x2x22x22xf32, #tpu.memory_space<vmem>>, vector<1x1x16x16xf32>
    %598 = vector.shape_cast %597 : vector<1x1x16x16xf32> to vector<16x16xf32>
    %c74 = arith.constant 74 : index
    %599 = memref.load %arg2[%c74] : memref<98xf32, #tpu.memory_space<smem>>
    %600 = vector.broadcast %599 : f32 to vector<16x16xf32>
    %601 = arith.mulf %600, %598 : vector<16x16xf32>
    %602 = arith.addf %594, %601 : vector<16x16xf32>
    %c3_i32_293 = arith.constant 3 : i32
    %603 = arith.addi %1, %c3_i32_293 : i32
    %c0_294 = arith.constant 0 : index
    %c1_295 = arith.constant 1 : index
    %604 = arith.index_cast %603 : i32 to index
    %c5_296 = arith.constant 5 : index
    %605 = vector.load %arg3[%c0_294, %c1_295, %604, %c5_296] : memref<1x2x22x22xf32, #tpu.memory_space<vmem>>, vector<1x1x16x16xf32>
    %606 = vector.shape_cast %605 : vector<1x1x16x16xf32> to vector<16x16xf32>
    %c75 = arith.constant 75 : index
    %607 = memref.load %arg2[%c75] : memref<98xf32, #tpu.memory_space<smem>>
    %608 = vector.broadcast %607 : f32 to vector<16x16xf32>
    %609 = arith.mulf %608, %606 : vector<16x16xf32>
    %610 = arith.addf %602, %609 : vector<16x16xf32>
    %c3_i32_297 = arith.constant 3 : i32
    %611 = arith.addi %1, %c3_i32_297 : i32
    %c0_298 = arith.constant 0 : index
    %c1_299 = arith.constant 1 : index
    %612 = arith.index_cast %611 : i32 to index
    %c6_300 = arith.constant 6 : index
    %613 = vector.load %arg3[%c0_298, %c1_299, %612, %c6_300] : memref<1x2x22x22xf32, #tpu.memory_space<vmem>>, vector<1x1x16x16xf32>
    %614 = vector.shape_cast %613 : vector<1x1x16x16xf32> to vector<16x16xf32>
    %c76 = arith.constant 76 : index
    %615 = memref.load %arg2[%c76] : memref<98xf32, #tpu.memory_space<smem>>
    %616 = vector.broadcast %615 : f32 to vector<16x16xf32>
    %617 = arith.mulf %616, %614 : vector<16x16xf32>
    %618 = arith.addf %610, %617 : vector<16x16xf32>
    %c4_i32_301 = arith.constant 4 : i32
    %619 = arith.addi %1, %c4_i32_301 : i32
    %c0_302 = arith.constant 0 : index
    %c1_303 = arith.constant 1 : index
    %620 = arith.index_cast %619 : i32 to index
    %c0_304 = arith.constant 0 : index
    %621 = vector.load %arg3[%c0_302, %c1_303, %620, %c0_304] : memref<1x2x22x22xf32, #tpu.memory_space<vmem>>, vector<1x1x16x16xf32>
    %622 = vector.shape_cast %621 : vector<1x1x16x16xf32> to vector<16x16xf32>
    %c77 = arith.constant 77 : index
    %623 = memref.load %arg2[%c77] : memref<98xf32, #tpu.memory_space<smem>>
    %624 = vector.broadcast %623 : f32 to vector<16x16xf32>
    %625 = arith.mulf %624, %622 : vector<16x16xf32>
    %626 = arith.addf %618, %625 : vector<16x16xf32>
    %c4_i32_305 = arith.constant 4 : i32
    %627 = arith.addi %1, %c4_i32_305 : i32
    %c0_306 = arith.constant 0 : index
    %c1_307 = arith.constant 1 : index
    %628 = arith.index_cast %627 : i32 to index
    %c1_308 = arith.constant 1 : index
    %629 = vector.load %arg3[%c0_306, %c1_307, %628, %c1_308] : memref<1x2x22x22xf32, #tpu.memory_space<vmem>>, vector<1x1x16x16xf32>
    %630 = vector.shape_cast %629 : vector<1x1x16x16xf32> to vector<16x16xf32>
    %c78 = arith.constant 78 : index
    %631 = memref.load %arg2[%c78] : memref<98xf32, #tpu.memory_space<smem>>
    %632 = vector.broadcast %631 : f32 to vector<16x16xf32>
    %633 = arith.mulf %632, %630 : vector<16x16xf32>
    %634 = arith.addf %626, %633 : vector<16x16xf32>
    %c4_i32_309 = arith.constant 4 : i32
    %635 = arith.addi %1, %c4_i32_309 : i32
    %c0_310 = arith.constant 0 : index
    %c1_311 = arith.constant 1 : index
    %636 = arith.index_cast %635 : i32 to index
    %c2_312 = arith.constant 2 : index
    %637 = vector.load %arg3[%c0_310, %c1_311, %636, %c2_312] : memref<1x2x22x22xf32, #tpu.memory_space<vmem>>, vector<1x1x16x16xf32>
    %638 = vector.shape_cast %637 : vector<1x1x16x16xf32> to vector<16x16xf32>
    %c79 = arith.constant 79 : index
    %639 = memref.load %arg2[%c79] : memref<98xf32, #tpu.memory_space<smem>>
    %640 = vector.broadcast %639 : f32 to vector<16x16xf32>
    %641 = arith.mulf %640, %638 : vector<16x16xf32>
    %642 = arith.addf %634, %641 : vector<16x16xf32>
    %c4_i32_313 = arith.constant 4 : i32
    %643 = arith.addi %1, %c4_i32_313 : i32
    %c0_314 = arith.constant 0 : index
    %c1_315 = arith.constant 1 : index
    %644 = arith.index_cast %643 : i32 to index
    %c3_316 = arith.constant 3 : index
    %645 = vector.load %arg3[%c0_314, %c1_315, %644, %c3_316] : memref<1x2x22x22xf32, #tpu.memory_space<vmem>>, vector<1x1x16x16xf32>
    %646 = vector.shape_cast %645 : vector<1x1x16x16xf32> to vector<16x16xf32>
    %c80 = arith.constant 80 : index
    %647 = memref.load %arg2[%c80] : memref<98xf32, #tpu.memory_space<smem>>
    %648 = vector.broadcast %647 : f32 to vector<16x16xf32>
    %649 = arith.mulf %648, %646 : vector<16x16xf32>
    %650 = arith.addf %642, %649 : vector<16x16xf32>
    %c4_i32_317 = arith.constant 4 : i32
    %651 = arith.addi %1, %c4_i32_317 : i32
    %c0_318 = arith.constant 0 : index
    %c1_319 = arith.constant 1 : index
    %652 = arith.index_cast %651 : i32 to index
    %c4_320 = arith.constant 4 : index
    %653 = vector.load %arg3[%c0_318, %c1_319, %652, %c4_320] : memref<1x2x22x22xf32, #tpu.memory_space<vmem>>, vector<1x1x16x16xf32>
    %654 = vector.shape_cast %653 : vector<1x1x16x16xf32> to vector<16x16xf32>
    %c81 = arith.constant 81 : index
    %655 = memref.load %arg2[%c81] : memref<98xf32, #tpu.memory_space<smem>>
    %656 = vector.broadcast %655 : f32 to vector<16x16xf32>
    %657 = arith.mulf %656, %654 : vector<16x16xf32>
    %658 = arith.addf %650, %657 : vector<16x16xf32>
    %c4_i32_321 = arith.constant 4 : i32
    %659 = arith.addi %1, %c4_i32_321 : i32
    %c0_322 = arith.constant 0 : index
    %c1_323 = arith.constant 1 : index
    %660 = arith.index_cast %659 : i32 to index
    %c5_324 = arith.constant 5 : index
    %661 = vector.load %arg3[%c0_322, %c1_323, %660, %c5_324] : memref<1x2x22x22xf32, #tpu.memory_space<vmem>>, vector<1x1x16x16xf32>
    %662 = vector.shape_cast %661 : vector<1x1x16x16xf32> to vector<16x16xf32>
    %c82 = arith.constant 82 : index
    %663 = memref.load %arg2[%c82] : memref<98xf32, #tpu.memory_space<smem>>
    %664 = vector.broadcast %663 : f32 to vector<16x16xf32>
    %665 = arith.mulf %664, %662 : vector<16x16xf32>
    %666 = arith.addf %658, %665 : vector<16x16xf32>
    %c4_i32_325 = arith.constant 4 : i32
    %667 = arith.addi %1, %c4_i32_325 : i32
    %c0_326 = arith.constant 0 : index
    %c1_327 = arith.constant 1 : index
    %668 = arith.index_cast %667 : i32 to index
    %c6_328 = arith.constant 6 : index
    %669 = vector.load %arg3[%c0_326, %c1_327, %668, %c6_328] : memref<1x2x22x22xf32, #tpu.memory_space<vmem>>, vector<1x1x16x16xf32>
    %670 = vector.shape_cast %669 : vector<1x1x16x16xf32> to vector<16x16xf32>
    %c83 = arith.constant 83 : index
    %671 = memref.load %arg2[%c83] : memref<98xf32, #tpu.memory_space<smem>>
    %672 = vector.broadcast %671 : f32 to vector<16x16xf32>
    %673 = arith.mulf %672, %670 : vector<16x16xf32>
    %674 = arith.addf %666, %673 : vector<16x16xf32>
    %c5_i32_329 = arith.constant 5 : i32
    %675 = arith.addi %1, %c5_i32_329 : i32
    %c0_330 = arith.constant 0 : index
    %c1_331 = arith.constant 1 : index
    %676 = arith.index_cast %675 : i32 to index
    %c0_332 = arith.constant 0 : index
    %677 = vector.load %arg3[%c0_330, %c1_331, %676, %c0_332] : memref<1x2x22x22xf32, #tpu.memory_space<vmem>>, vector<1x1x16x16xf32>
    %678 = vector.shape_cast %677 : vector<1x1x16x16xf32> to vector<16x16xf32>
    %c84 = arith.constant 84 : index
    %679 = memref.load %arg2[%c84] : memref<98xf32, #tpu.memory_space<smem>>
    %680 = vector.broadcast %679 : f32 to vector<16x16xf32>
    %681 = arith.mulf %680, %678 : vector<16x16xf32>
    %682 = arith.addf %674, %681 : vector<16x16xf32>
    %c5_i32_333 = arith.constant 5 : i32
    %683 = arith.addi %1, %c5_i32_333 : i32
    %c0_334 = arith.constant 0 : index
    %c1_335 = arith.constant 1 : index
    %684 = arith.index_cast %683 : i32 to index
    %c1_336 = arith.constant 1 : index
    %685 = vector.load %arg3[%c0_334, %c1_335, %684, %c1_336] : memref<1x2x22x22xf32, #tpu.memory_space<vmem>>, vector<1x1x16x16xf32>
    %686 = vector.shape_cast %685 : vector<1x1x16x16xf32> to vector<16x16xf32>
    %c85 = arith.constant 85 : index
    %687 = memref.load %arg2[%c85] : memref<98xf32, #tpu.memory_space<smem>>
    %688 = vector.broadcast %687 : f32 to vector<16x16xf32>
    %689 = arith.mulf %688, %686 : vector<16x16xf32>
    %690 = arith.addf %682, %689 : vector<16x16xf32>
    %c5_i32_337 = arith.constant 5 : i32
    %691 = arith.addi %1, %c5_i32_337 : i32
    %c0_338 = arith.constant 0 : index
    %c1_339 = arith.constant 1 : index
    %692 = arith.index_cast %691 : i32 to index
    %c2_340 = arith.constant 2 : index
    %693 = vector.load %arg3[%c0_338, %c1_339, %692, %c2_340] : memref<1x2x22x22xf32, #tpu.memory_space<vmem>>, vector<1x1x16x16xf32>
    %694 = vector.shape_cast %693 : vector<1x1x16x16xf32> to vector<16x16xf32>
    %c86 = arith.constant 86 : index
    %695 = memref.load %arg2[%c86] : memref<98xf32, #tpu.memory_space<smem>>
    %696 = vector.broadcast %695 : f32 to vector<16x16xf32>
    %697 = arith.mulf %696, %694 : vector<16x16xf32>
    %698 = arith.addf %690, %697 : vector<16x16xf32>
    %c5_i32_341 = arith.constant 5 : i32
    %699 = arith.addi %1, %c5_i32_341 : i32
    %c0_342 = arith.constant 0 : index
    %c1_343 = arith.constant 1 : index
    %700 = arith.index_cast %699 : i32 to index
    %c3_344 = arith.constant 3 : index
    %701 = vector.load %arg3[%c0_342, %c1_343, %700, %c3_344] : memref<1x2x22x22xf32, #tpu.memory_space<vmem>>, vector<1x1x16x16xf32>
    %702 = vector.shape_cast %701 : vector<1x1x16x16xf32> to vector<16x16xf32>
    %c87 = arith.constant 87 : index
    %703 = memref.load %arg2[%c87] : memref<98xf32, #tpu.memory_space<smem>>
    %704 = vector.broadcast %703 : f32 to vector<16x16xf32>
    %705 = arith.mulf %704, %702 : vector<16x16xf32>
    %706 = arith.addf %698, %705 : vector<16x16xf32>
    %c5_i32_345 = arith.constant 5 : i32
    %707 = arith.addi %1, %c5_i32_345 : i32
    %c0_346 = arith.constant 0 : index
    %c1_347 = arith.constant 1 : index
    %708 = arith.index_cast %707 : i32 to index
    %c4_348 = arith.constant 4 : index
    %709 = vector.load %arg3[%c0_346, %c1_347, %708, %c4_348] : memref<1x2x22x22xf32, #tpu.memory_space<vmem>>, vector<1x1x16x16xf32>
    %710 = vector.shape_cast %709 : vector<1x1x16x16xf32> to vector<16x16xf32>
    %c88 = arith.constant 88 : index
    %711 = memref.load %arg2[%c88] : memref<98xf32, #tpu.memory_space<smem>>
    %712 = vector.broadcast %711 : f32 to vector<16x16xf32>
    %713 = arith.mulf %712, %710 : vector<16x16xf32>
    %714 = arith.addf %706, %713 : vector<16x16xf32>
    %c5_i32_349 = arith.constant 5 : i32
    %715 = arith.addi %1, %c5_i32_349 : i32
    %c0_350 = arith.constant 0 : index
    %c1_351 = arith.constant 1 : index
    %716 = arith.index_cast %715 : i32 to index
    %c5_352 = arith.constant 5 : index
    %717 = vector.load %arg3[%c0_350, %c1_351, %716, %c5_352] : memref<1x2x22x22xf32, #tpu.memory_space<vmem>>, vector<1x1x16x16xf32>
    %718 = vector.shape_cast %717 : vector<1x1x16x16xf32> to vector<16x16xf32>
    %c89 = arith.constant 89 : index
    %719 = memref.load %arg2[%c89] : memref<98xf32, #tpu.memory_space<smem>>
    %720 = vector.broadcast %719 : f32 to vector<16x16xf32>
    %721 = arith.mulf %720, %718 : vector<16x16xf32>
    %722 = arith.addf %714, %721 : vector<16x16xf32>
    %c5_i32_353 = arith.constant 5 : i32
    %723 = arith.addi %1, %c5_i32_353 : i32
    %c0_354 = arith.constant 0 : index
    %c1_355 = arith.constant 1 : index
    %724 = arith.index_cast %723 : i32 to index
    %c6_356 = arith.constant 6 : index
    %725 = vector.load %arg3[%c0_354, %c1_355, %724, %c6_356] : memref<1x2x22x22xf32, #tpu.memory_space<vmem>>, vector<1x1x16x16xf32>
    %726 = vector.shape_cast %725 : vector<1x1x16x16xf32> to vector<16x16xf32>
    %c90 = arith.constant 90 : index
    %727 = memref.load %arg2[%c90] : memref<98xf32, #tpu.memory_space<smem>>
    %728 = vector.broadcast %727 : f32 to vector<16x16xf32>
    %729 = arith.mulf %728, %726 : vector<16x16xf32>
    %730 = arith.addf %722, %729 : vector<16x16xf32>
    %c6_i32_357 = arith.constant 6 : i32
    %731 = arith.addi %1, %c6_i32_357 : i32
    %c0_358 = arith.constant 0 : index
    %c1_359 = arith.constant 1 : index
    %732 = arith.index_cast %731 : i32 to index
    %c0_360 = arith.constant 0 : index
    %733 = vector.load %arg3[%c0_358, %c1_359, %732, %c0_360] : memref<1x2x22x22xf32, #tpu.memory_space<vmem>>, vector<1x1x16x16xf32>
    %734 = vector.shape_cast %733 : vector<1x1x16x16xf32> to vector<16x16xf32>
    %c91 = arith.constant 91 : index
    %735 = memref.load %arg2[%c91] : memref<98xf32, #tpu.memory_space<smem>>
    %736 = vector.broadcast %735 : f32 to vector<16x16xf32>
    %737 = arith.mulf %736, %734 : vector<16x16xf32>
    %738 = arith.addf %730, %737 : vector<16x16xf32>
    %c6_i32_361 = arith.constant 6 : i32
    %739 = arith.addi %1, %c6_i32_361 : i32
    %c0_362 = arith.constant 0 : index
    %c1_363 = arith.constant 1 : index
    %740 = arith.index_cast %739 : i32 to index
    %c1_364 = arith.constant 1 : index
    %741 = vector.load %arg3[%c0_362, %c1_363, %740, %c1_364] : memref<1x2x22x22xf32, #tpu.memory_space<vmem>>, vector<1x1x16x16xf32>
    %742 = vector.shape_cast %741 : vector<1x1x16x16xf32> to vector<16x16xf32>
    %c92 = arith.constant 92 : index
    %743 = memref.load %arg2[%c92] : memref<98xf32, #tpu.memory_space<smem>>
    %744 = vector.broadcast %743 : f32 to vector<16x16xf32>
    %745 = arith.mulf %744, %742 : vector<16x16xf32>
    %746 = arith.addf %738, %745 : vector<16x16xf32>
    %c6_i32_365 = arith.constant 6 : i32
    %747 = arith.addi %1, %c6_i32_365 : i32
    %c0_366 = arith.constant 0 : index
    %c1_367 = arith.constant 1 : index
    %748 = arith.index_cast %747 : i32 to index
    %c2_368 = arith.constant 2 : index
    %749 = vector.load %arg3[%c0_366, %c1_367, %748, %c2_368] : memref<1x2x22x22xf32, #tpu.memory_space<vmem>>, vector<1x1x16x16xf32>
    %750 = vector.shape_cast %749 : vector<1x1x16x16xf32> to vector<16x16xf32>
    %c93 = arith.constant 93 : index
    %751 = memref.load %arg2[%c93] : memref<98xf32, #tpu.memory_space<smem>>
    %752 = vector.broadcast %751 : f32 to vector<16x16xf32>
    %753 = arith.mulf %752, %750 : vector<16x16xf32>
    %754 = arith.addf %746, %753 : vector<16x16xf32>
    %c6_i32_369 = arith.constant 6 : i32
    %755 = arith.addi %1, %c6_i32_369 : i32
    %c0_370 = arith.constant 0 : index
    %c1_371 = arith.constant 1 : index
    %756 = arith.index_cast %755 : i32 to index
    %c3_372 = arith.constant 3 : index
    %757 = vector.load %arg3[%c0_370, %c1_371, %756, %c3_372] : memref<1x2x22x22xf32, #tpu.memory_space<vmem>>, vector<1x1x16x16xf32>
    %758 = vector.shape_cast %757 : vector<1x1x16x16xf32> to vector<16x16xf32>
    %c94 = arith.constant 94 : index
    %759 = memref.load %arg2[%c94] : memref<98xf32, #tpu.memory_space<smem>>
    %760 = vector.broadcast %759 : f32 to vector<16x16xf32>
    %761 = arith.mulf %760, %758 : vector<16x16xf32>
    %762 = arith.addf %754, %761 : vector<16x16xf32>
    %c6_i32_373 = arith.constant 6 : i32
    %763 = arith.addi %1, %c6_i32_373 : i32
    %c0_374 = arith.constant 0 : index
    %c1_375 = arith.constant 1 : index
    %764 = arith.index_cast %763 : i32 to index
    %c4_376 = arith.constant 4 : index
    %765 = vector.load %arg3[%c0_374, %c1_375, %764, %c4_376] : memref<1x2x22x22xf32, #tpu.memory_space<vmem>>, vector<1x1x16x16xf32>
    %766 = vector.shape_cast %765 : vector<1x1x16x16xf32> to vector<16x16xf32>
    %c95 = arith.constant 95 : index
    %767 = memref.load %arg2[%c95] : memref<98xf32, #tpu.memory_space<smem>>
    %768 = vector.broadcast %767 : f32 to vector<16x16xf32>
    %769 = arith.mulf %768, %766 : vector<16x16xf32>
    %770 = arith.addf %762, %769 : vector<16x16xf32>
    %c6_i32_377 = arith.constant 6 : i32
    %771 = arith.addi %1, %c6_i32_377 : i32
    %c0_378 = arith.constant 0 : index
    %c1_379 = arith.constant 1 : index
    %772 = arith.index_cast %771 : i32 to index
    %c5_380 = arith.constant 5 : index
    %773 = vector.load %arg3[%c0_378, %c1_379, %772, %c5_380] : memref<1x2x22x22xf32, #tpu.memory_space<vmem>>, vector<1x1x16x16xf32>
    %774 = vector.shape_cast %773 : vector<1x1x16x16xf32> to vector<16x16xf32>
    %c96 = arith.constant 96 : index
    %775 = memref.load %arg2[%c96] : memref<98xf32, #tpu.memory_space<smem>>
    %776 = vector.broadcast %775 : f32 to vector<16x16xf32>
    %777 = arith.mulf %776, %774 : vector<16x16xf32>
    %778 = arith.addf %770, %777 : vector<16x16xf32>
    %c6_i32_381 = arith.constant 6 : i32
    %779 = arith.addi %1, %c6_i32_381 : i32
    %c0_382 = arith.constant 0 : index
    %c1_383 = arith.constant 1 : index
    %780 = arith.index_cast %779 : i32 to index
    %c6_384 = arith.constant 6 : index
    %781 = vector.load %arg3[%c0_382, %c1_383, %780, %c6_384] : memref<1x2x22x22xf32, #tpu.memory_space<vmem>>, vector<1x1x16x16xf32>
    %782 = vector.shape_cast %781 : vector<1x1x16x16xf32> to vector<16x16xf32>
    %c97 = arith.constant 97 : index
    %783 = memref.load %arg2[%c97] : memref<98xf32, #tpu.memory_space<smem>>
    %784 = vector.broadcast %783 : f32 to vector<16x16xf32>
    %785 = arith.mulf %784, %782 : vector<16x16xf32>
    %786 = arith.addf %778, %785 : vector<16x16xf32>
    %787 = arith.negf %786 : vector<16x16xf32>
    %788 = math.exp %787 : vector<16x16xf32>
    %cst_385 = arith.constant 1.000000e+00 : f32
    %789 = vector.broadcast %cst_385 : f32 to vector<16x16xf32>
    %790 = arith.addf %789, %788 : vector<16x16xf32>
    %791 = arith.divf %789, %790 : vector<16x16xf32>
    %c0_386 = arith.constant 0 : index
    %c0_387 = arith.constant 0 : index
    %c0_388 = arith.constant 0 : index
    %c0_389 = arith.constant 0 : index
    %792 = vector.load %arg4[%c0_386, %c0_387, %c0_388, %c0_389] : memref<1x1x16x16xf32, #tpu.memory_space<vmem>>, vector<1x1x16x16xf32>
    %793 = vector.shape_cast %792 : vector<1x1x16x16xf32> to vector<16x16xf32>
    %794 = vector.shape_cast %791 : vector<16x16xf32> to vector<1x1x16x16xf32>
    tpu.vector_store %arg4[%c0_386, %c0_387, %c0_388, %c0_389], %794 {strides = array<i32>} : memref<1x1x16x16xf32, #tpu.memory_space<vmem>>, vector<1x1x16x16xf32>,
    return
  }
  func.func @transform_0(%arg0: i32, %arg1: i32) -> i32 {
    %c0_i32 = arith.constant 0 : i32
    %c0_i32_0 = arith.constant 0 : i32
    return %c0_i32 : i32
  }
  func.func @transform_1(%arg0: i32, %arg1: i32) -> (i32, i32, i32, i32) {
    %c0_i32 = arith.constant 0 : i32
    %c0_i32_0 = arith.constant 0 : i32
    %c0_i32_1 = arith.constant 0 : i32
    %c0_i32_2 = arith.constant 0 : i32
    return %arg0, %c0_i32, %c0_i32_0, %c0_i32_1 : i32, i32, i32, i32
  }
  func.func @transform_2(%arg0: i32, %arg1: i32) -> (i32, i32, i32, i32) {
    %c0_i32 = arith.constant 0 : i32
    %c0_i32_0 = arith.constant 0 : i32
    %c0_i32_1 = arith.constant 0 : i32
    return %arg0, %c0_i32, %arg1, %c0_i32_0 : i32, i32, i32, i32
  }
}

</mosaic_0001>

<llo_original>
// kernel: spatial_attention.2
$region0: #{spatial_attention.2}
  #allocation0 [shape = 'u32[]', space=smem, size = 0x4, offset = 0x4, fixed_abs, tag = 'smem constant byte address 0x4 - core index']
  #allocation1 [shape = 'u32[72,128]{1,0:T(1,128)}', space=vmem, size = 0x9000, scoped, tag = 'internal scratch']
  %s0 = inlined_call_operand.vmem [shape: f32[2,4,256], index: 0, kind: input, shape index: {}]
  %s1 = inlined_call_operand.vmem [shape: f32[2,2,256], index: 1, kind: output, shape index: {}]
  %s2 = sld [smem:[#allocation0]]
  $region37: #{spatial_attention.2} parent=0
    _
  %s4 = ssub.s32 1, %s2
  %s5 = scalar_select 0, %s4, %s2
  loop: start=0, step=1, limit=4
  $region2: #{spatial_attention.2} parent=0 // loop_pre_header
    _
  $region3: #{spatial_attention.2} parent=0 // loop_header
    %s7 = sphi 0, %s11
    %p8 = scmp.ge.s32.totalorder %s7, 4
    %s14 = sphi 0, %s26
    %s15 = sphi 0, %s22
    %s16 = sphi 0, %s14
    %s17 = sphi 0, %s15
    %s18 = sphi 0, %s16
    %s19 = sphi 0, %s17
    %s31 = sphi 0, %s33
    %s34 = sphi 0, %s31
    %s35 = sphi 0, %s34
    %s51 = sphi 0, %s35
    %s59 = sphi 0, %s61
    %s62 = sphi 0, %s59
    %s63 = sphi 0, %s62
    %s79 = sphi 0, %s63
  $region4: #{spatial_attention.2} parent=0 // loop_header_branch
    %10 = sbr.rel (%p8) target = $region8
  $region5: #{spatial_attention.2} parent=0 // loop_body
    %s12 = ssub.s32 %s7, 1
    %s13 = ssub.s32 %s7, 2
    %s20 = sadd.s32 1, %s15
    %p21 = scmp.ge.s32.totalorder %s20, 1
    %s22 = scalar_select %p21, 0, %s20
    %s23 = sadd.s32 1, %s14
    %s24 = scalar_select %p21, %s23, %s14
    %p25 = scmp.ge.s32.totalorder %s24, 2
    %s26 = scalar_select %p25, 0, %s24
    %s27 = ssub.s32 %s14, %s26
    %s28 = ssub.s32 %s15, %s22
    %s29 = sor.u32 %s27, %s28
    %p30 = scmp.eq.s32.totalorder %s29, 0
    %s32 = sadd.s32 %s31, 1
    %s33 = scalar_select %p30, %s31, %s32
    %p36 = pneg %p30
    %p37 = scmp.eq.s32.totalorder %s7, 1
    %p38 = por %p36, %p37
    %p39 = scmp.ne.s32.totalorder %s31, %s34
    %p40 = scmp.eq.s32.totalorder %s7, 0
    %p41 = por %p39, %p40
    %p42 = scmp.ne.s32.totalorder %s31, %s34
    %p43 = scmp.eq.s32.totalorder %s12, 1
    %p44 = por %p42, %p43
    %p45 = scmp.ne.s32.totalorder %s34, %s35
    %p46 = scmp.eq.s32.totalorder %s12, 0
    %p47 = por %p45, %p46
    %p48 = scmp.ne.s32.totalorder %s34, %s35
    %p49 = scmp.eq.s32.totalorder %s13, 1
    %p50 = por %p48, %p49
    %p52 = scmp.ne.s32.totalorder %s35, %s51
    %p53 = scmp.eq.s32.totalorder %s13, 0
    %p54 = por %p52, %p53
    %s55 = ssub.s32 %s14, %s26
    %s56 = ssub.s32 %s15, %s22
    %s57 = sor.u32 %s55, %s56
    %p58 = scmp.eq.s32.totalorder %s57, 0
    %s60 = sadd.s32 %s59, 1
    %s61 = scalar_select %p58, %s59, %s60
    %p64 = pneg %p58
    %p65 = scmp.eq.s32.totalorder %s7, 1
    %p66 = por %p64, %p65
    %p67 = scmp.ne.s32.totalorder %s59, %s62
    %p68 = scmp.eq.s32.totalorder %s7, 0
    %p69 = por %p67, %p68
    %p70 = scmp.ne.s32.totalorder %s59, %s62
    %p71 = scmp.eq.s32.totalorder %s12, 1
    %p72 = por %p70, %p71
    %p73 = scmp.ne.s32.totalorder %s62, %s63
    %p74 = scmp.eq.s32.totalorder %s12, 0
    %p75 = por %p73, %p74
    %p76 = scmp.ne.s32.totalorder %s62, %s63
    %p77 = scmp.eq.s32.totalorder %s13, 1
    %p78 = por %p76, %p77
    %p80 = scmp.ne.s32.totalorder %s63, %s79
    %p81 = scmp.eq.s32.totalorder %s13, 0
    %p82 = por %p80, %p81
    %p83 = scmp.le.s32.totalorder 1, %s7
    %p84 = scmp.lt.s32.totalorder %s7, 3
    %p85 = pnand %p83, %p84
    %p86 = pneg %p85
    // Predicated region
    $region9: #{spatial_attention.2} parent=5 // pred_check
      _
    $region10: #{spatial_attention.2} parent=5 // pred_check_branch
      %88 = sbr.rel (%p85) target = $region12
    $region11: #{spatial_attention.2} parent=5 // pred_region
      %s89 = ssub.s32 %s7, 1
    $region12: #{spatial_attention.2} parent=5 // pred_fallthru
      _
    %p90 = scmp.lt.s32.totalorder %s7, 2
    // Predicated region
    $region13: #{spatial_attention.2} parent=5 // pred_check
      %p91 = pneg %p90
    $region14: #{spatial_attention.2} parent=5 // pred_check_branch
      %93 = sbr.rel (%p91) target = $region16
    $region15: #{spatial_attention.2} parent=5 // pred_region
      // Predicated region
      $region17: #{spatial_attention.2} parent=15 // pred_check
        %p94 = pneg %p41
      $region18: #{spatial_attention.2} parent=15 // pred_check_branch
        %96 = sbr.rel (%p94) target = $region20
      $region19: #{spatial_attention.2} parent=15 // pred_region
        %s97 = smul.u32 2, %s15
        %p98 = scmp.lt.s32.totalorder %s14, 1
        %s99 = scalar_select %p98, %s14, 1
        %p100 = scmp.lt.s32.totalorder %s97, 1
        %s101 = scalar_select %p100, %s97, 1
        %s102 = smul.addr %s99, 2
        %s103 = sadd.s32 %s101, %s102
        %s104 = smul.addr %s103, 4
        %s105 = scalar_lea.vmem %s0, %s104
        %s106 = smul.u32 2, %s15
      $region20: #{spatial_attention.2} parent=15 // pred_fallthru
        _
    $region16: #{spatial_attention.2} parent=5 // pred_fallthru
      _
    %p107 = scmp.le.s32.totalorder 1, %s7
    %p108 = scmp.lt.s32.totalorder %s7, 3
    %p109 = pnand %p107, %p108
    %p110 = pneg %p109
    // Predicated region
    $region21: #{spatial_attention.2} parent=5 // pred_check
      _
    $region22: #{spatial_attention.2} parent=5 // pred_check_branch
      %112 = sbr.rel (%p109) target = $region24
    $region23: #{spatial_attention.2} parent=5 // pred_region
      %s113 = ssub.s32 %s7, 1
      %s114 = smul.u32 2, %s17
      %p115 = scmp.lt.s32.totalorder %s16, 1
      %s116 = scalar_select %p115, %s16, 1
      %p117 = scmp.lt.s32.totalorder %s114, 1
      %s118 = scalar_select %p117, %s114, 1
      %s119 = smul.addr %s116, 2
      %s120 = sadd.s32 %s118, %s119
      %s121 = smul.addr %s120, 4
      %s122 = scalar_lea.vmem %s0, %s121
      %p123 = pneg %p47
      %p124 = pneg %p44
      %p125 = pneg %p75
      %p126 = pneg %p72
      %s127 = smul.u32 2, %s17
      %p128 = scmp.lt.s32.totalorder %s16, 1
      %s129 = scalar_select %p128, %s16, 1
      %p130 = scmp.lt.s32.totalorder %s127, 1
      %s131 = scalar_select %p130, %s127, 1
      %s132 = smul.addr %s129, 2
      %s133 = sadd.s32 %s131, %s132
      %s134 = smul.addr %s133, 2
      %s135 = scalar_lea.vmem %s1, %s134
      %s136 = smul.u32 2, %s17
      %p137 = scmp.lt.s32.totalorder %s16, 1
      %s138 = scalar_select %p137, %s16, 1
      %p139 = scmp.lt.s32.totalorder %s136, 1
      %s140 = scalar_select %p139, %s136, 1
      %s141 = smul.addr %s138, 2
      %s142 = sadd.s32 %s140, %s141
      %s143 = smul.addr %s142, 4
      %s144 = scalar_lea.vmem %s0, %s143
      %s145 = smul.u32 2, %s17
      %s146 = smul.u32 2, %s17
      %p147 = scmp.lt.s32.totalorder %s16, 1
      %s148 = scalar_select %p147, %s16, 1
      %p149 = scmp.lt.s32.totalorder %s146, 1
      %s150 = scalar_select %p149, %s146, 1
      %s151 = smul.addr %s148, 2
      %s152 = sadd.s32 %s150, %s151
      %s153 = smul.addr %s152, 2
      %s154 = scalar_lea.vmem %s1, %s153
      %s155 = smul.u32 2, %s17
      %v156 = vld [vmem:[%s144] sm:$0xff]
      %158 = vst [vmem:[#allocation1] ss:$2 sm:$0xff] %v156
      %v159 = vld.sshfl [vmem:[#allocation1] sm:$0xff pattern:$0x75316420]
      %v160 = vld.sshfl [vmem:[#allocation1 + $0x8] sm:$0xff pattern:$0x75316420]
      %vm163 = vcmask 1043456
      %v164 = vsel %vm163, %v159, 0.0
      %v165 = vrot.slane %v164, 4
      %v166 = vadd.f32 %v164, %v165
      %v167 = vrot.slane %v166, 2
      %v168 = vadd.f32 %v166, %v167
      %v169 = vrot.slane %v168, 1
      %v170 = vadd.f32 %v168, %v169
      %v171 = vsel %vm163, %v160, 0.0
      %v172 = vrot.slane %v171, 4
      %v173 = vadd.f32 %v171, %v172
      %v174 = vrot.slane %v173, 2
      %v175 = vadd.f32 %v173, %v174
      %v176 = vrot.slane %v175, 1
      %v177 = vadd.f32 %v175, %v176
      %v178 = vmul.f32 %v170, 0.25
      %v179 = vmul.f32 %v177, 0.25
      %180 = vst [vmem:[#allocation1] ss:$2 sm:$0xff] %v156
      %v181 = vld.sshfl [vmem:[#allocation1] sm:$0xff pattern:$0x75316420]
      %v182 = vld.sshfl [vmem:[#allocation1 + $0x8] sm:$0xff pattern:$0x75316420]
      %v185 = vsel %vm163, %v181, -inf
      %v186 = vrot.slane %v185, 4
      %v187 = vmax.f32 %v185, %v186
      %v188 = vrot.slane %v187, 2
      %v189 = vmax.f32 %v187, %v188
      %v190 = vrot.slane %v189, 1
      %v191 = vmax.f32 %v189, %v190
      %v192 = vsel %vm163, %v182, -inf
      %v193 = vrot.slane %v192, 4
      %v194 = vmax.f32 %v192, %v193
      %v195 = vrot.slane %v194, 2
      %v196 = vmax.f32 %v194, %v195
      %v197 = vrot.slane %v196, 1
      %v198 = vmax.f32 %v196, %v197
      %vm199 = vcmask 1040384
      %v200 = vsel %vm199, %v178, %v191
      %v201 = vsel %vm199, %v179, %v198
      %v204 = vrot.slane %v201, 6
      %vm205 = vcmask 1041408
      %v206 = vsel %vm205, %v200, %v204
      %208 = vst [vmem:[%s154] sm:$0xf] %v206
      %s209 = smul.u32 2, %s17
      %p210 = scmp.lt.s32.totalorder %s16, 1
      %s211 = scalar_select %p210, %s16, 1
      %p212 = scmp.lt.s32.totalorder %s209, 1
      %s213 = scalar_select %p212, %s209, 1
      %s214 = smul.addr %s211, 2
      %s215 = sadd.s32 %s213, %s214
      %s216 = smul.addr %s215, 2
      %s217 = scalar_lea.vmem %s1, %s216
      // Predicated region
      $region25: #{spatial_attention.2} parent=23 // pred_check
        %p218 = pneg %p72
      $region26: #{spatial_attention.2} parent=23 // pred_check_branch
        %220 = sbr.rel (%p218) target = $region28
      $region27: #{spatial_attention.2} parent=23 // pred_region
        %s221 = smul.u32 2, %s17
      $region28: #{spatial_attention.2} parent=23 // pred_fallthru
        _
    $region24: #{spatial_attention.2} parent=5 // pred_fallthru
      _
    %p222 = scmp.le.s32.totalorder 2, %s7
    // Predicated region
    $region29: #{spatial_attention.2} parent=5 // pred_check
      %p223 = pneg %p222
    $region30: #{spatial_attention.2} parent=5 // pred_check_branch
      %225 = sbr.rel (%p223) target = $region32
    $region31: #{spatial_attention.2} parent=5 // pred_region
      %s226 = ssub.s32 %s7, 2
      // Predicated region
      $region33: #{spatial_attention.2} parent=31 // pred_check
        %p227 = pneg %p78
      $region34: #{spatial_attention.2} parent=31 // pred_check_branch
        %229 = sbr.rel (%p227) target = $region36
      $region35: #{spatial_attention.2} parent=31 // pred_region
        %s230 = smul.u32 2, %s19
        %p231 = scmp.lt.s32.totalorder %s18, 1
        %s232 = scalar_select %p231, %s18, 1
        %p233 = scmp.lt.s32.totalorder %s230, 1
        %s234 = scalar_select %p233, %s230, 1
        %s235 = smul.addr %s232, 2
        %s236 = sadd.s32 %s234, %s235
        %s237 = smul.addr %s236, 2
        %s238 = scalar_lea.vmem %s1, %s237
      $region36: #{spatial_attention.2} parent=31 // pred_fallthru
        _
    $region32: #{spatial_attention.2} parent=5 // pred_fallthru
      _
  $region6: #{spatial_attention.2} parent=0 // loop_footer
    %s11 = sadd.s32 1, %s7
  $region7: #{spatial_attention.2} parent=0 // loop_footer_branch
    %6 = sbr.rel target = $region3
  $region8: #{spatial_attention.2} parent=0 // loop_exit
    _

// kernel: spatial_attention.3
$region0: #{spatial_attention.3}
  #allocation0 [shape = 'u32[]', space=smem, size = 0x4, offset = 0x4, fixed_abs, tag = 'smem constant byte address 0x4 - core index']
  #allocation1 [shape = 'u32[72,128]{1,0:T(1,128)}', space=vmem, size = 0x9000, scoped, tag = 'internal scratch']
  %s0 = inlined_call_operand.vmem [shape: f32[98], index: 0, kind: input, shape index: {}]
  %s1 = inlined_call_operand.vmem [shape: f32[2,2,22,22], index: 1, kind: input, shape index: {}]
  %s2 = inlined_call_operand.hbm [shape: f32[2,1,16,16], index: 2, kind: output, shape index: {}]
  %s3 = sld [smem:[#allocation0]]
  $region45: #{spatial_attention.3} parent=0
    _
  %s5 = ssub.s32 1, %s3
  %s6 = scalar_select 0, %s5, %s3
  $region1: #{spatial_attention.3} parent=0
    #allocation2 [shape = 'u8[512]{0}', space=smem, size = 0x200, scoped, tag = 'input window, operand 0, single buffered']
    #allocation3 [shape = 's32[2]{0}', space=sflag, size = 0x8, scoped, tag = 'scoped memory for spatial_attention.3']
    #allocation4 [shape = 's32[2]{0}', space=sflag, size = 0x8, scoped, tag = 'scoped memory for spatial_attention.3']
    #allocation5 [shape = 'u8[16384]{0}', space=vmem, size = 0x4000, scoped, tag = 'output window, operand 0']
    %7 = vsyncpa [#allocation4], 0
    %8 = vsyncpa [#allocation3], 0
    %s9 = scalar_lea.sflag [#allocation3], 1
    %10 = vsyncpa %s9, 0
    loop: start=0, step=1, limit=4
    $region2: #{spatial_attention.3} parent=1 // loop_pre_header
      _
    $region3: #{spatial_attention.3} parent=1 // loop_header
      %s12 = sphi 0, %s16
      %p13 = scmp.ge.s32.totalorder %s12, 4
      %s19 = sphi 0, %s31
      %s20 = sphi 0, %s27
      %s21 = sphi 0, %s19
      %s22 = sphi 0, %s20
      %s23 = sphi 0, %s21
      %s24 = sphi 0, %s22
      %s32 = sphi 0, %s32
      %s34 = sphi 0, %s32
      %s35 = sphi 0, %s34
      %s49 = sphi 0, %s35
      %s55 = sphi 0, %s57
      %s58 = sphi 0, %s55
      %s59 = sphi 0, %s58
      %s75 = sphi 0, %s59
      %s83 = sphi 0, %s85
      %s86 = sphi 0, %s83
      %s87 = sphi 0, %s86
      %s103 = sphi 0, %s87
    $region4: #{spatial_attention.3} parent=1 // loop_header_branch
      %15 = sbr.rel (%p13) target = $region8
    $region5: #{spatial_attention.3} parent=1 // loop_body
      %s17 = ssub.s32 %s12, 1
      %s18 = ssub.s32 %s12, 2
      %s25 = sadd.s32 1, %s20
      %p26 = scmp.ge.s32.totalorder %s25, 1
      %s27 = scalar_select %p26, 0, %s25
      %s28 = sadd.s32 1, %s19
      %s29 = scalar_select %p26, %s28, %s19
      %p30 = scmp.ge.s32.totalorder %s29, 2
      %s31 = scalar_select %p30, 0, %s29
      %s33 = sadd.s32 %s32, 1
      %p36 = scmp.eq.s32.totalorder %s12, 1
      %p37 = scmp.ne.s32.totalorder %s32, %s34
      %p38 = scmp.eq.s32.totalorder %s12, 0
      %p39 = por %p37, %p38
      %p40 = scmp.ne.s32.totalorder %s32, %s34
      %p41 = scmp.eq.s32.totalorder %s17, 1
      %p42 = por %p40, %p41
      %p43 = scmp.ne.s32.totalorder %s34, %s35
      %p44 = scmp.eq.s32.totalorder %s17, 0
      %p45 = por %p43, %p44
      %p46 = scmp.ne.s32.totalorder %s34, %s35
      %p47 = scmp.eq.s32.totalorder %s18, 1
      %p48 = por %p46, %p47
      %p50 = scmp.ne.s32.totalorder %s35, %s49
      %p51 = scmp.eq.s32.totalorder %s18, 0
      %p52 = por %p50, %p51
      %s53 = ssub.s32 %s19, %s31
      %p54 = scmp.eq.s32.totalorder %s53, 0
      %s56 = sadd.s32 %s55, 1
      %s57 = scalar_select %p54, %s55, %s56
      %p60 = pneg %p54
      %p61 = scmp.eq.s32.totalorder %s12, 1
      %p62 = por %p60, %p61
      %p63 = scmp.ne.s32.totalorder %s55, %s58
      %p64 = scmp.eq.s32.totalorder %s12, 0
      %p65 = por %p63, %p64
      %p66 = scmp.ne.s32.totalorder %s55, %s58
      %p67 = scmp.eq.s32.totalorder %s17, 1
      %p68 = por %p66, %p67
      %p69 = scmp.ne.s32.totalorder %s58, %s59
      %p70 = scmp.eq.s32.totalorder %s17, 0
      %p71 = por %p69, %p70
      %p72 = scmp.ne.s32.totalorder %s58, %s59
      %p73 = scmp.eq.s32.totalorder %s18, 1
      %p74 = por %p72, %p73
      %p76 = scmp.ne.s32.totalorder %s59, %s75
      %p77 = scmp.eq.s32.totalorder %s18, 0
      %p78 = por %p76, %p77
      %s79 = ssub.s32 %s19, %s31
      %s80 = ssub.s32 %s20, %s27
      %s81 = sor.u32 %s79, %s80
      %p82 = scmp.eq.s32.totalorder %s81, 0
      %s84 = sadd.s32 %s83, 1
      %s85 = scalar_select %p82, %s83, %s84
      %p88 = pneg %p82
      %p89 = scmp.eq.s32.totalorder %s12, 1
      %p90 = por %p88, %p89
      %p91 = scmp.ne.s32.totalorder %s83, %s86
      %p92 = scmp.eq.s32.totalorder %s12, 0
      %p93 = por %p91, %p92
      %p94 = scmp.ne.s32.totalorder %s83, %s86
      %p95 = scmp.eq.s32.totalorder %s17, 1
      %p96 = por %p94, %p95
      %p97 = scmp.ne.s32.totalorder %s86, %s87
      %p98 = scmp.eq.s32.totalorder %s17, 0
      %p99 = por %p97, %p98
      %p100 = scmp.ne.s32.totalorder %s86, %s87
      %p101 = scmp.eq.s32.totalorder %s18, 1
      %p102 = por %p100, %p101
      %p104 = scmp.ne.s32.totalorder %s87, %s103
      %p105 = scmp.eq.s32.totalorder %s18, 0
      %p106 = por %p104, %p105
      %p107 = scmp.le.s32.totalorder 1, %s12
      %p108 = scmp.lt.s32.totalorder %s12, 3
      %p109 = pnand %p107, %p108
      %p110 = pneg %p109
      // Predicated region
      $region9: #{spatial_attention.3} parent=5 // pred_check
        _
      $region10: #{spatial_attention.3} parent=5 // pred_check_branch
        %112 = sbr.rel (%p109) target = $region12
      $region11: #{spatial_attention.3} parent=5 // pred_region
        %s113 = ssub.s32 %s12, 1
        // Predicated region
        $region13: #{spatial_attention.3} parent=11 // pred_check
          %p114 = pneg %p45
        $region14: #{spatial_attention.3} parent=11 // pred_check_branch
          %116 = sbr.rel (%p114) target = $region16
        $region15: #{spatial_attention.3} parent=11 // pred_region
          %118 = vsyncadd [#allocation4], 0
          %s120 = sshll.u32 %s0, 4
          %s121 = int_to_ptr.vmem [resolvable:$true] %s120
          %123 = dma.vmem_to_smem %s121, 16, [#allocation2], [#allocation4]
        $region16: #{spatial_attention.3} parent=11 // pred_fallthru
          _
      $region12: #{spatial_attention.3} parent=5 // pred_fallthru
        _
      %p124 = scmp.lt.s32.totalorder %s12, 2
      // Predicated region
      $region17: #{spatial_attention.3} parent=5 // pred_check
        %p125 = pneg %p124
      $region18: #{spatial_attention.3} parent=5 // pred_check_branch
        %127 = sbr.rel (%p125) target = $region20
      $region19: #{spatial_attention.3} parent=5 // pred_region
        // Predicated region
        $region21: #{spatial_attention.3} parent=19 // pred_check
          %p128 = pneg %p65
        $region22: #{spatial_attention.3} parent=19 // pred_check_branch
          %130 = sbr.rel (%p128) target = $region24
        $region23: #{spatial_attention.3} parent=19 // pred_region
          %p131 = scmp.lt.s32.totalorder %s19, 1
          %s132 = scalar_select %p131, %s19, 1
          %s133 = smul.addr %s132, 6
          %s134 = smul.addr %s133, 8
          %s135 = scalar_lea.vmem %s1, %s134
        $region24: #{spatial_attention.3} parent=19 // pred_fallthru
          _
      $region20: #{spatial_attention.3} parent=5 // pred_fallthru
        _
      %p136 = scmp.le.s32.totalorder 1, %s12
      %p137 = scmp.lt.s32.totalorder %s12, 3
      %p138 = pnand %p136, %p137
      %p139 = pneg %p138
      // Predicated region
      $region25: #{spatial_attention.3} parent=5 // pred_check
        _
      $region26: #{spatial_attention.3} parent=5 // pred_check_branch
        %141 = sbr.rel (%p138) target = $region28
      $region27: #{spatial_attention.3} parent=5 // pred_region
        %s142 = ssub.s32 %s12, 1
        // Predicated region
        $region29: #{spatial_attention.3} parent=27 // pred_check
          %p143 = pneg %p45
        $region30: #{spatial_attention.3} parent=27 // pred_check_branch
          %145 = sbr.rel (%p143) target = $region32
        $region31: #{spatial_attention.3} parent=27 // pred_region
          %147 = dma.done [#allocation4], 16
        $region32: #{spatial_attention.3} parent=27 // pred_fallthru
          _
        %148 = sfence
        %p149 = pneg %p45
        %p150 = pneg %p42
        %p151 = scmp.lt.s32.totalorder %s21, 1
        %s152 = scalar_select %p151, %s21, 1
        %s153 = smul.addr %s152, 6
        %s154 = smul.addr %s153, 8
        %s155 = scalar_lea.vmem %s1, %s154
        %p156 = pneg %p71
        %p157 = pneg %p68
        %p158 = pneg %p99
        %p159 = pneg %p96
        %s160 = sand.u32 %s86, 1
        %s161 = scalar_lea.sflag [#allocation3], %s160
        %s162 = sand.u32 %s86, 1
        %s163 = smul.addr %s162, 16
        %s164 = scalar_lea.vmem [#allocation5], %s163
        %p165 = scmp.lt.s32.totalorder %s21, 1
        %s166 = scalar_select %p165, %s21, 1
        %s167 = smul.addr %s166, 6
        %s168 = smul.addr %s167, 8
        %s169 = scalar_lea.vmem %s1, %s168
        %s170 = smul.u32 2, %s22
        %s171 = smul.u32 %s22, 16
        %s172 = scalar_lea.vmem %s169, %s171
        %v173 = vld [vmem:[%s172] sm:$0xff]
        %v174 = vld [vmem:[%s172 + $0x8] sm:$0xff]
        %s175 = sld [smem:[#allocation2]]
        %v176 = vstv %s175
        %v177 = vmul.f32 %v176, %v173
        %v178 = vmul.f32 %v176, %v174
        %v179 = vadd.f32 %v177, 0.0
        %v180 = vadd.f32 %v178, 0.0
        %s181 = sld [smem:[#allocation2 + $0x1]]
        %v182 = vstv %s181
        %v183 = vmul.f32 %v182, %v173
        %v184 = vmul.f32 %v182, %v174
        %187 = vrot.lane.b32.xlu0 %v183, 127
        %v188 = vpop.permute.xlu0 %187
        %189 = vrot.lane.b32.xlu0 %v184, 127
        %v190 = vpop.permute.xlu0 %189
        %v193 = vadd.f32 %v179, %v188
        %v194 = vadd.f32 %v180, %v190
        %s195 = sld [smem:[#allocation2 + $0x2]]
        %v196 = vstv %s195
        %v197 = vmul.f32 %v196, %v173
        %v198 = vmul.f32 %v196, %v174
        %201 = vrot.lane.b32.xlu0 %v197, 126
        %v202 = vpop.permute.xlu0 %201
        %203 = vrot.lane.b32.xlu0 %v198, 126
        %v204 = vpop.permute.xlu0 %203
        %v207 = vadd.f32 %v193, %v202
        %v208 = vadd.f32 %v194, %v204
        %s209 = sld [smem:[#allocation2 + $0x3]]
        %v210 = vstv %s209
        %v211 = vmul.f32 %v210, %v173
        %v212 = vmul.f32 %v210, %v174
        %215 = vrot.lane.b32.xlu0 %v211, 125
        %v216 = vpop.permute.xlu0 %215
        %217 = vrot.lane.b32.xlu0 %v212, 125
        %v218 = vpop.permute.xlu0 %217
        %v221 = vadd.f32 %v207, %v216
        %v222 = vadd.f32 %v208, %v218
        %s223 = sld [smem:[#allocation2 + $0x4]]
        %v224 = vstv %s223
        %v225 = vmul.f32 %v224, %v173
        %v226 = vmul.f32 %v224, %v174
        %229 = vrot.lane.b32.xlu0 %v225, 124
        %v230 = vpop.permute.xlu0 %229
        %231 = vrot.lane.b32.xlu0 %v226, 124
        %v232 = vpop.permute.xlu0 %231
        %v235 = vadd.f32 %v221, %v230
        %v236 = vadd.f32 %v222, %v232
        %s237 = sld [smem:[#allocation2 + $0x5]]
        %v238 = vstv %s237
        %v239 = vmul.f32 %v238, %v173
        %v240 = vmul.f32 %v238, %v174
        %243 = vrot.lane.b32.xlu0 %v239, 123
        %v244 = vpop.permute.xlu0 %243
        %245 = vrot.lane.b32.xlu0 %v240, 123
        %v246 = vpop.permute.xlu0 %245
        %v249 = vadd.f32 %v235, %v244
        %v250 = vadd.f32 %v236, %v246
        %s251 = sld [smem:[#allocation2 + $0x6]]
        %v252 = vstv %s251
        %v253 = vmul.f32 %v252, %v173
        %v254 = vmul.f32 %v252, %v174
        %257 = vrot.lane.b32.xlu0 %v253, 122
        %v258 = vpop.permute.xlu0 %257
        %259 = vrot.lane.b32.xlu0 %v254, 122
        %v260 = vpop.permute.xlu0 %259
        %v263 = vadd.f32 %v249, %v258
        %v264 = vadd.f32 %v250, %v260
        %s265 = sadd.s32 %s171, 1
        %s266 = scalar_lea.vmem %s169, %s265
        %v267 = vld [vmem:[%s266] sm:$0xff]
        %v268 = vld [vmem:[%s266 + $0x8] sm:$0xff]
        %s269 = sld [smem:[#allocation2 + $0x7]]
        %v270 = vstv %s269
        %v271 = vmul.f32 %v270, %v267
        %v272 = vmul.f32 %v270, %v268
        %v273 = vadd.f32 %v263, %v271
        %v274 = vadd.f32 %v264, %v272
        %s275 = sld [smem:[#allocation2 + $0x8]]
        %v276 = vstv %s275
        %v277 = vmul.f32 %v276, %v267
        %v278 = vmul.f32 %v276, %v268
        %281 = vrot.lane.b32.xlu0 %v277, 127
        %v282 = vpop.permute.xlu0 %281
        %283 = vrot.lane.b32.xlu0 %v278, 127
        %v284 = vpop.permute.xlu0 %283
        %v287 = vadd.f32 %v273, %v282
        %v288 = vadd.f32 %v274, %v284
        %s289 = sld [smem:[#allocation2 + $0x9]]
        %v290 = vstv %s289
        %v291 = vmul.f32 %v290, %v267
        %v292 = vmul.f32 %v290, %v268
        %295 = vrot.lane.b32.xlu0 %v291, 126
        %v296 = vpop.permute.xlu0 %295
        %297 = vrot.lane.b32.xlu0 %v292, 126
        %v298 = vpop.permute.xlu0 %297
        %v301 = vadd.f32 %v287, %v296
        %v302 = vadd.f32 %v288, %v298
        %s303 = sld [smem:[#allocation2 + $0xa]]
        %v304 = vstv %s303
        %v305 = vmul.f32 %v304, %v267
        %v306 = vmul.f32 %v304, %v268
        %309 = vrot.lane.b32.xlu0 %v305, 125
        %v310 = vpop.permute.xlu0 %309
        %311 = vrot.lane.b32.xlu0 %v306, 125
        %v312 = vpop.permute.xlu0 %311
        %v315 = vadd.f32 %v301, %v310
        %v316 = vadd.f32 %v302, %v312
        %s317 = sld [smem:[#allocation2 + $0xb]]
        %v318 = vstv %s317
        %v319 = vmul.f32 %v318, %v267
        %v320 = vmul.f32 %v318, %v268
        %323 = vrot.lane.b32.xlu0 %v319, 124
        %v324 = vpop.permute.xlu0 %323
        %325 = vrot.lane.b32.xlu0 %v320, 124
        %v326 = vpop.permute.xlu0 %325
        %v329 = vadd.f32 %v315, %v324
        %v330 = vadd.f32 %v316, %v326
        %s331 = sld [smem:[#allocation2 + $0xc]]
        %v332 = vstv %s331
        %v333 = vmul.f32 %v332, %v267
        %v334 = vmul.f32 %v332, %v268
        %337 = vrot.lane.b32.xlu0 %v333, 123
        %v338 = vpop.permute.xlu0 %337
        %339 = vrot.lane.b32.xlu0 %v334, 123
        %v340 = vpop.permute.xlu0 %339
        %v343 = vadd.f32 %v329, %v338
        %v344 = vadd.f32 %v330, %v340
        %s345 = sld [smem:[#allocation2 + $0xd]]
        %v346 = vstv %s345
        %v347 = vmul.f32 %v346, %v267
        %v348 = vmul.f32 %v346, %v268
        %351 = vrot.lane.b32.xlu0 %v347, 122
        %v352 = vpop.permute.xlu0 %351
        %353 = vrot.lane.b32.xlu0 %v348, 122
        %v354 = vpop.permute.xlu0 %353
        %v357 = vadd.f32 %v343, %v352
        %v358 = vadd.f32 %v344, %v354
        %s359 = sadd.s32 %s171, 2
        %s360 = scalar_lea.vmem %s169, %s359
        %v361 = vld [vmem:[%s360] sm:$0xff]
        %v362 = vld [vmem:[%s360 + $0x8] sm:$0xff]
        %s363 = sld [smem:[#allocation2 + $0xe]]
        %v364 = vstv %s363
        %v365 = vmul.f32 %v364, %v361
        %v366 = vmul.f32 %v364, %v362
        %v367 = vadd.f32 %v357, %v365
        %v368 = vadd.f32 %v358, %v366
        %s369 = sld [smem:[#allocation2 + $0xf]]
        %v370 = vstv %s369
        %v371 = vmul.f32 %v370, %v361
        %v372 = vmul.f32 %v370, %v362
        %375 = vrot.lane.b32.xlu0 %v371, 127
        %v376 = vpop.permute.xlu0 %375
        %377 = vrot.lane.b32.xlu0 %v372, 127
        %v378 = vpop.permute.xlu0 %377
        %v381 = vadd.f32 %v367, %v376
        %v382 = vadd.f32 %v368, %v378
        %s383 = sld [smem:[#allocation2 + $0x10]]
        %v384 = vstv %s383
        %v385 = vmul.f32 %v384, %v361
        %v386 = vmul.f32 %v384, %v362
        %389 = vrot.lane.b32.xlu0 %v385, 126
        %v390 = vpop.permute.xlu0 %389
        %391 = vrot.lane.b32.xlu0 %v386, 126
        %v392 = vpop.permute.xlu0 %391
        %v395 = vadd.f32 %v381, %v390
        %v396 = vadd.f32 %v382, %v392
        %s397 = sld [smem:[#allocation2 + $0x11]]
        %v398 = vstv %s397
        %v399 = vmul.f32 %v398, %v361
        %v400 = vmul.f32 %v398, %v362
        %403 = vrot.lane.b32.xlu0 %v399, 125
        %v404 = vpop.permute.xlu0 %403
        %405 = vrot.lane.b32.xlu0 %v400, 125
        %v406 = vpop.permute.xlu0 %405
        %v409 = vadd.f32 %v395, %v404
        %v410 = vadd.f32 %v396, %v406
        %s411 = sld [smem:[#allocation2 + $0x12]]
        %v412 = vstv %s411
        %v413 = vmul.f32 %v412, %v361
        %v414 = vmul.f32 %v412, %v362
        %417 = vrot.lane.b32.xlu0 %v413, 124
        %v418 = vpop.permute.xlu0 %417
        %419 = vrot.lane.b32.xlu0 %v414, 124
        %v420 = vpop.permute.xlu0 %419
        %v423 = vadd.f32 %v409, %v418
        %v424 = vadd.f32 %v410, %v420
        %s425 = sld [smem:[#allocation2 + $0x13]]
        %v426 = vstv %s425
        %v427 = vmul.f32 %v426, %v361
        %v428 = vmul.f32 %v426, %v362
        %431 = vrot.lane.b32.xlu0 %v427, 123
        %v432 = vpop.permute.xlu0 %431
        %433 = vrot.lane.b32.xlu0 %v428, 123
        %v434 = vpop.permute.xlu0 %433
        %v437 = vadd.f32 %v423, %v432
        %v438 = vadd.f32 %v424, %v434
        %s439 = sld [smem:[#allocation2 + $0x14]]
        %v440 = vstv %s439
        %v441 = vmul.f32 %v440, %v361
        %v442 = vmul.f32 %v440, %v362
        %445 = vrot.lane.b32.xlu0 %v441, 122
        %v446 = vpop.permute.xlu0 %445
        %447 = vrot.lane.b32.xlu0 %v442, 122
        %v448 = vpop.permute.xlu0 %447
        %v451 = vadd.f32 %v437, %v446
        %v452 = vadd.f32 %v438, %v448
        %s453 = sadd.s32 %s171, 3
        %s454 = scalar_lea.vmem %s169, %s453
        %v455 = vld [vmem:[%s454] sm:$0xff]
        %v456 = vld [vmem:[%s454 + $0x8] sm:$0xff]
        %s457 = sld [smem:[#allocation2 + $0x15]]
        %v458 = vstv %s457
        %v459 = vmul.f32 %v458, %v455
        %v460 = vmul.f32 %v458, %v456
        %v461 = vadd.f32 %v451, %v459
        %v462 = vadd.f32 %v452, %v460
        %s463 = sld [smem:[#allocation2 + $0x16]]
        %v464 = vstv %s463
        %v465 = vmul.f32 %v464, %v455
        %v466 = vmul.f32 %v464, %v456
        %469 = vrot.lane.b32.xlu0 %v465, 127
        %v470 = vpop.permute.xlu0 %469
        %471 = vrot.lane.b32.xlu0 %v466, 127
        %v472 = vpop.permute.xlu0 %471
        %v475 = vadd.f32 %v461, %v470
        %v476 = vadd.f32 %v462, %v472
        %s477 = sld [smem:[#allocation2 + $0x17]]
        %v478 = vstv %s477
        %v479 = vmul.f32 %v478, %v455
        %v480 = vmul.f32 %v478, %v456
        %483 = vrot.lane.b32.xlu0 %v479, 126
        %v484 = vpop.permute.xlu0 %483
        %485 = vrot.lane.b32.xlu0 %v480, 126
        %v486 = vpop.permute.xlu0 %485
        %v489 = vadd.f32 %v475, %v484
        %v490 = vadd.f32 %v476, %v486
        %s491 = sld [smem:[#allocation2 + $0x18]]
        %v492 = vstv %s491
        %v493 = vmul.f32 %v492, %v455
        %v494 = vmul.f32 %v492, %v456
        %497 = vrot.lane.b32.xlu0 %v493, 125
        %v498 = vpop.permute.xlu0 %497
        %499 = vrot.lane.b32.xlu0 %v494, 125
        %v500 = vpop.permute.xlu0 %499
        %v503 = vadd.f32 %v489, %v498
        %v504 = vadd.f32 %v490, %v500
        %s505 = sld [smem:[#allocation2 + $0x19]]
        %v506 = vstv %s505
        %v507 = vmul.f32 %v506, %v455
        %v508 = vmul.f32 %v506, %v456
        %511 = vrot.lane.b32.xlu0 %v507, 124
        %v512 = vpop.permute.xlu0 %511
        %513 = vrot.lane.b32.xlu0 %v508, 124
        %v514 = vpop.permute.xlu0 %513
        %v517 = vadd.f32 %v503, %v512
        %v518 = vadd.f32 %v504, %v514
        %s519 = sld [smem:[#allocation2 + $0x1a]]
        %v520 = vstv %s519
        %v521 = vmul.f32 %v520, %v455
        %v522 = vmul.f32 %v520, %v456
        %525 = vrot.lane.b32.xlu0 %v521, 123
        %v526 = vpop.permute.xlu0 %525
        %527 = vrot.lane.b32.xlu0 %v522, 123
        %v528 = vpop.permute.xlu0 %527
        %v531 = vadd.f32 %v517, %v526
        %v532 = vadd.f32 %v518, %v528
        %s533 = sld [smem:[#allocation2 + $0x1b]]
        %v534 = vstv %s533
        %v535 = vmul.f32 %v534, %v455
        %v536 = vmul.f32 %v534, %v456
        %539 = vrot.lane.b32.xlu0 %v535, 122
        %v540 = vpop.permute.xlu0 %539
        %541 = vrot.lane.b32.xlu0 %v536, 122
        %v542 = vpop.permute.xlu0 %541
        %v545 = vadd.f32 %v531, %v540
        %v546 = vadd.f32 %v532, %v542
        %s547 = sadd.s32 %s171, 4
        %s548 = scalar_lea.vmem %s169, %s547
        %v549 = vld [vmem:[%s548] sm:$0xff]
        %v550 = vld [vmem:[%s548 + $0x8] sm:$0xff]
        %s551 = sld [smem:[#allocation2 + $0x1c]]
        %v552 = vstv %s551
        %v553 = vmul.f32 %v552, %v549
        %v554 = vmul.f32 %v552, %v550
        %v555 = vadd.f32 %v545, %v553
        %v556 = vadd.f32 %v546, %v554
        %s557 = sld [smem:[#allocation2 + $0x1d]]
        %v558 = vstv %s557
        %v559 = vmul.f32 %v558, %v549
        %v560 = vmul.f32 %v558, %v550
        %563 = vrot.lane.b32.xlu0 %v559, 127
        %v564 = vpop.permute.xlu0 %563
        %565 = vrot.lane.b32.xlu0 %v560, 127
        %v566 = vpop.permute.xlu0 %565
        %v569 = vadd.f32 %v555, %v564
        %v570 = vadd.f32 %v556, %v566
        %s571 = sld [smem:[#allocation2 + $0x1e]]
        %v572 = vstv %s571
        %v573 = vmul.f32 %v572, %v549
        %v574 = vmul.f32 %v572, %v550
        %577 = vrot.lane.b32.xlu0 %v573, 126
        %v578 = vpop.permute.xlu0 %577
        %579 = vrot.lane.b32.xlu0 %v574, 126
        %v580 = vpop.permute.xlu0 %579
        %v583 = vadd.f32 %v569, %v578
        %v584 = vadd.f32 %v570, %v580
        %s585 = sld [smem:[#allocation2 + $0x1f]]
        %v586 = vstv %s585
        %v587 = vmul.f32 %v586, %v549
        %v588 = vmul.f32 %v586, %v550
        %591 = vrot.lane.b32.xlu0 %v587, 125
        %v592 = vpop.permute.xlu0 %591
        %593 = vrot.lane.b32.xlu0 %v588, 125
        %v594 = vpop.permute.xlu0 %593
        %v597 = vadd.f32 %v583, %v592
        %v598 = vadd.f32 %v584, %v594
        %s599 = sld [smem:[#allocation2 + $0x20]]
        %v600 = vstv %s599
        %v601 = vmul.f32 %v600, %v549
        %v602 = vmul.f32 %v600, %v550
        %605 = vrot.lane.b32.xlu0 %v601, 124
        %v606 = vpop.permute.xlu0 %605
        %607 = vrot.lane.b32.xlu0 %v602, 124
        %v608 = vpop.permute.xlu0 %607
        %v611 = vadd.f32 %v597, %v606
        %v612 = vadd.f32 %v598, %v608
        %s613 = sld [smem:[#allocation2 + $0x21]]
        %v614 = vstv %s613
        %v615 = vmul.f32 %v614, %v549
        %v616 = vmul.f32 %v614, %v550
        %619 = vrot.lane.b32.xlu0 %v615, 123
        %v620 = vpop.permute.xlu0 %619
        %621 = vrot.lane.b32.xlu0 %v616, 123
        %v622 = vpop.permute.xlu0 %621
        %v625 = vadd.f32 %v611, %v620
        %v626 = vadd.f32 %v612, %v622
        %s627 = sld [smem:[#allocation2 + $0x22]]
        %v628 = vstv %s627
        %v629 = vmul.f32 %v628, %v549
        %v630 = vmul.f32 %v628, %v550
        %633 = vrot.lane.b32.xlu0 %v629, 122
        %v634 = vpop.permute.xlu0 %633
        %635 = vrot.lane.b32.xlu0 %v630, 122
        %v636 = vpop.permute.xlu0 %635
        %v639 = vadd.f32 %v625, %v634
        %v640 = vadd.f32 %v626, %v636
        %s641 = sadd.s32 %s171, 5
        %s642 = scalar_lea.vmem %s169, %s641
        %v643 = vld [vmem:[%s642] sm:$0xff]
        %v644 = vld [vmem:[%s642 + $0x8] sm:$0xff]
        %s645 = sld [smem:[#allocation2 + $0x23]]
        %v646 = vstv %s645
        %v647 = vmul.f32 %v646, %v643
        %v648 = vmul.f32 %v646, %v644
        %v649 = vadd.f32 %v639, %v647
        %v650 = vadd.f32 %v640, %v648
        %s651 = sld [smem:[#allocation2 + $0x24]]
        %v652 = vstv %s651
        %v653 = vmul.f32 %v652, %v643
        %v654 = vmul.f32 %v652, %v644
        %657 = vrot.lane.b32.xlu0 %v653, 127
        %v658 = vpop.permute.xlu0 %657
        %659 = vrot.lane.b32.xlu0 %v654, 127
        %v660 = vpop.permute.xlu0 %659
        %v663 = vadd.f32 %v649, %v658
        %v664 = vadd.f32 %v650, %v660
        %s665 = sld [smem:[#allocation2 + $0x25]]
        %v666 = vstv %s665
        %v667 = vmul.f32 %v666, %v643
        %v668 = vmul.f32 %v666, %v644
        %671 = vrot.lane.b32.xlu0 %v667, 126
        %v672 = vpop.permute.xlu0 %671
        %673 = vrot.lane.b32.xlu0 %v668, 126
        %v674 = vpop.permute.xlu0 %673
        %v677 = vadd.f32 %v663, %v672
        %v678 = vadd.f32 %v664, %v674
        %s679 = sld [smem:[#allocation2 + $0x26]]
        %v680 = vstv %s679
        %v681 = vmul.f32 %v680, %v643
        %v682 = vmul.f32 %v680, %v644
        %685 = vrot.lane.b32.xlu0 %v681, 125
        %v686 = vpop.permute.xlu0 %685
        %687 = vrot.lane.b32.xlu0 %v682, 125
        %v688 = vpop.permute.xlu0 %687
        %v691 = vadd.f32 %v677, %v686
        %v692 = vadd.f32 %v678, %v688
        %s693 = sld [smem:[#allocation2 + $0x27]]
        %v694 = vstv %s693
        %v695 = vmul.f32 %v694, %v643
        %v696 = vmul.f32 %v694, %v644
        %699 = vrot.lane.b32.xlu0 %v695, 124
        %v700 = vpop.permute.xlu0 %699
        %701 = vrot.lane.b32.xlu0 %v696, 124
        %v702 = vpop.permute.xlu0 %701
        %v705 = vadd.f32 %v691, %v700
        %v706 = vadd.f32 %v692, %v702
        %s707 = sld [smem:[#allocation2 + $0x28]]
        %v708 = vstv %s707
        %v709 = vmul.f32 %v708, %v643
        %v710 = vmul.f32 %v708, %v644
        %713 = vrot.lane.b32.xlu0 %v709, 123
        %v714 = vpop.permute.xlu0 %713
        %715 = vrot.lane.b32.xlu0 %v710, 123
        %v716 = vpop.permute.xlu0 %715
        %v719 = vadd.f32 %v705, %v714
        %v720 = vadd.f32 %v706, %v716
        %s721 = sld [smem:[#allocation2 + $0x29]]
        %v722 = vstv %s721
        %v723 = vmul.f32 %v722, %v643
        %v724 = vmul.f32 %v722, %v644
        %727 = vrot.lane.b32.xlu0 %v723, 122
        %v728 = vpop.permute.xlu0 %727
        %729 = vrot.lane.b32.xlu0 %v724, 122
        %v730 = vpop.permute.xlu0 %729
        %v733 = vadd.f32 %v719, %v728
        %v734 = vadd.f32 %v720, %v730
        %s735 = sadd.s32 %s171, 6
        %s736 = scalar_lea.vmem %s169, %s735
        %v737 = vld [vmem:[%s736] sm:$0xff]
        %v738 = vld [vmem:[%s736 + $0x8] sm:$0xff]
        %s739 = sld [smem:[#allocation2 + $0x2a]]
        %v740 = vstv %s739
        %v741 = vmul.f32 %v740, %v737
        %v742 = vmul.f32 %v740, %v738
        %v743 = vadd.f32 %v733, %v741
        %v744 = vadd.f32 %v734, %v742
        %s745 = sld [smem:[#allocation2 + $0x2b]]
        %v746 = vstv %s745
        %v747 = vmul.f32 %v746, %v737
        %v748 = vmul.f32 %v746, %v738
        %751 = vrot.lane.b32.xlu0 %v747, 127
        %v752 = vpop.permute.xlu0 %751
        %753 = vrot.lane.b32.xlu0 %v748, 127
        %v754 = vpop.permute.xlu0 %753
        %v757 = vadd.f32 %v743, %v752
        %v758 = vadd.f32 %v744, %v754
        %s759 = sld [smem:[#allocation2 + $0x2c]]
        %v760 = vstv %s759
        %v761 = vmul.f32 %v760, %v737
        %v762 = vmul.f32 %v760, %v738
        %765 = vrot.lane.b32.xlu0 %v761, 126
        %v766 = vpop.permute.xlu0 %765
        %767 = vrot.lane.b32.xlu0 %v762, 126
        %v768 = vpop.permute.xlu0 %767
        %v771 = vadd.f32 %v757, %v766
        %v772 = vadd.f32 %v758, %v768
        %s773 = sld [smem:[#allocation2 + $0x2d]]
        %v774 = vstv %s773
        %v775 = vmul.f32 %v774, %v737
        %v776 = vmul.f32 %v774, %v738
        %779 = vrot.lane.b32.xlu0 %v775, 125
        %v780 = vpop.permute.xlu0 %779
        %781 = vrot.lane.b32.xlu0 %v776, 125
        %v782 = vpop.permute.xlu0 %781
        %v785 = vadd.f32 %v771, %v780
        %v786 = vadd.f32 %v772, %v782
        %s787 = sld [smem:[#allocation2 + $0x2e]]
        %v788 = vstv %s787
        %v789 = vmul.f32 %v788, %v737
        %v790 = vmul.f32 %v788, %v738
        %793 = vrot.lane.b32.xlu0 %v789, 124
        %v794 = vpop.permute.xlu0 %793
        %795 = vrot.lane.b32.xlu0 %v790, 124
        %v796 = vpop.permute.xlu0 %795
        %v799 = vadd.f32 %v785, %v794
        %v800 = vadd.f32 %v786, %v796
        %s801 = sld [smem:[#allocation2 + $0x2f]]
        %v802 = vstv %s801
        %v803 = vmul.f32 %v802, %v737
        %v804 = vmul.f32 %v802, %v738
        %807 = vrot.lane.b32.xlu0 %v803, 123
        %v808 = vpop.permute.xlu0 %807
        %809 = vrot.lane.b32.xlu0 %v804, 123
        %v810 = vpop.permute.xlu0 %809
        %v813 = vadd.f32 %v799, %v808
        %v814 = vadd.f32 %v800, %v810
        %s815 = sld [smem:[#allocation2 + $0x30]]
        %v816 = vstv %s815
        %v817 = vmul.f32 %v816, %v737
        %v818 = vmul.f32 %v816, %v738
        %821 = vrot.lane.b32.xlu0 %v817, 122
        %v822 = vpop.permute.xlu0 %821
        %823 = vrot.lane.b32.xlu0 %v818, 122
        %v824 = vpop.permute.xlu0 %823
        %v827 = vadd.f32 %v813, %v822
        %v828 = vadd.f32 %v814, %v824
        %s829 = sadd.s32 %s171, 24
        %s830 = scalar_lea.vmem %s169, %s829
        %v831 = vld [vmem:[%s830] sm:$0xff]
        %v832 = vld [vmem:[%s830 + $0x8] sm:$0xff]
        %s833 = sld [smem:[#allocation2 + $0x31]]
        %v834 = vstv %s833
        %v835 = vmul.f32 %v834, %v831
        %v836 = vmul.f32 %v834, %v832
        %v837 = vadd.f32 %v827, %v835
        %v838 = vadd.f32 %v828, %v836
        %s839 = sld [smem:[#allocation2 + $0x32]]
        %v840 = vstv %s839
        %v841 = vmul.f32 %v840, %v831
        %v842 = vmul.f32 %v840, %v832
        %845 = vrot.lane.b32.xlu0 %v841, 127
        %v846 = vpop.permute.xlu0 %845
        %847 = vrot.lane.b32.xlu0 %v842, 127
        %v848 = vpop.permute.xlu0 %847
        %v851 = vadd.f32 %v837, %v846
        %v852 = vadd.f32 %v838, %v848
        %s853 = sld [smem:[#allocation2 + $0x33]]
        %v854 = vstv %s853
        %v855 = vmul.f32 %v854, %v831
        %v856 = vmul.f32 %v854, %v832
        %859 = vrot.lane.b32.xlu0 %v855, 126
        %v860 = vpop.permute.xlu0 %859
        %861 = vrot.lane.b32.xlu0 %v856, 126
        %v862 = vpop.permute.xlu0 %861
        %v865 = vadd.f32 %v851, %v860
        %v866 = vadd.f32 %v852, %v862
        %s867 = sld [smem:[#allocation2 + $0x34]]
        %v868 = vstv %s867
        %v869 = vmul.f32 %v868, %v831
        %v870 = vmul.f32 %v868, %v832
        %873 = vrot.lane.b32.xlu0 %v869, 125
        %v874 = vpop.permute.xlu0 %873
        %875 = vrot.lane.b32.xlu0 %v870, 125
        %v876 = vpop.permute.xlu0 %875
        %v879 = vadd.f32 %v865, %v874
        %v880 = vadd.f32 %v866, %v876
        %s881 = sld [smem:[#allocation2 + $0x35]]
        %v882 = vstv %s881
        %v883 = vmul.f32 %v882, %v831
        %v884 = vmul.f32 %v882, %v832
        %887 = vrot.lane.b32.xlu0 %v883, 124
        %v888 = vpop.permute.xlu0 %887
        %889 = vrot.lane.b32.xlu0 %v884, 124
        %v890 = vpop.permute.xlu0 %889
        %v893 = vadd.f32 %v879, %v888
        %v894 = vadd.f32 %v880, %v890
        %s895 = sld [smem:[#allocation2 + $0x36]]
        %v896 = vstv %s895
        %v897 = vmul.f32 %v896, %v831
        %v898 = vmul.f32 %v896, %v832
        %901 = vrot.lane.b32.xlu0 %v897, 123
        %v902 = vpop.permute.xlu0 %901
        %903 = vrot.lane.b32.xlu0 %v898, 123
        %v904 = vpop.permute.xlu0 %903
        %v907 = vadd.f32 %v893, %v902
        %v908 = vadd.f32 %v894, %v904
        %s909 = sld [smem:[#allocation2 + $0x37]]
        %v910 = vstv %s909
        %v911 = vmul.f32 %v910, %v831
        %v912 = vmul.f32 %v910, %v832
        %915 = vrot.lane.b32.xlu0 %v911, 122
        %v916 = vpop.permute.xlu0 %915
        %917 = vrot.lane.b32.xlu0 %v912, 122
        %v918 = vpop.permute.xlu0 %917
        %v921 = vadd.f32 %v907, %v916
        %v922 = vadd.f32 %v908, %v918
        %s923 = sadd.s32 %s265, 24
        %s924 = scalar_lea.vmem %s169, %s923
        %v925 = vld [vmem:[%s924] sm:$0xff]
        %v926 = vld [vmem:[%s924 + $0x8] sm:$0xff]
        %s927 = sld [smem:[#allocation2 + $0x38]]
        %v928 = vstv %s927
        %v929 = vmul.f32 %v928, %v925
        %v930 = vmul.f32 %v928, %v926
        %v931 = vadd.f32 %v921, %v929
        %v932 = vadd.f32 %v922, %v930
        %s933 = sld [smem:[#allocation2 + $0x39]]
        %v934 = vstv %s933
        %v935 = vmul.f32 %v934, %v925
        %v936 = vmul.f32 %v934, %v926
        %939 = vrot.lane.b32.xlu0 %v935, 127
        %v940 = vpop.permute.xlu0 %939
        %941 = vrot.lane.b32.xlu0 %v936, 127
        %v942 = vpop.permute.xlu0 %941
        %v945 = vadd.f32 %v931, %v940
        %v946 = vadd.f32 %v932, %v942
        %s947 = sld [smem:[#allocation2 + $0x3a]]
        %v948 = vstv %s947
        %v949 = vmul.f32 %v948, %v925
        %v950 = vmul.f32 %v948, %v926
        %953 = vrot.lane.b32.xlu0 %v949, 126
        %v954 = vpop.permute.xlu0 %953
        %955 = vrot.lane.b32.xlu0 %v950, 126
        %v956 = vpop.permute.xlu0 %955
        %v959 = vadd.f32 %v945, %v954
        %v960 = vadd.f32 %v946, %v956
        %s961 = sld [smem:[#allocation2 + $0x3b]]
        %v962 = vstv %s961
        %v963 = vmul.f32 %v962, %v925
        %v964 = vmul.f32 %v962, %v926
        %967 = vrot.lane.b32.xlu0 %v963, 125
        %v968 = vpop.permute.xlu0 %967
        %969 = vrot.lane.b32.xlu0 %v964, 125
        %v970 = vpop.permute.xlu0 %969
        %v973 = vadd.f32 %v959, %v968
        %v974 = vadd.f32 %v960, %v970
        %s975 = sld [smem:[#allocation2 + $0x3c]]
        %v976 = vstv %s975
        %v977 = vmul.f32 %v976, %v925
        %v978 = vmul.f32 %v976, %v926
        %981 = vrot.lane.b32.xlu0 %v977, 124
        %v982 = vpop.permute.xlu0 %981
        %983 = vrot.lane.b32.xlu0 %v978, 124
        %v984 = vpop.permute.xlu0 %983
        %v987 = vadd.f32 %v973, %v982
        %v988 = vadd.f32 %v974, %v984
        %s989 = sld [smem:[#allocation2 + $0x3d]]
        %v990 = vstv %s989
        %v991 = vmul.f32 %v990, %v925
        %v992 = vmul.f32 %v990, %v926
        %995 = vrot.lane.b32.xlu0 %v991, 123
        %v996 = vpop.permute.xlu0 %995
        %997 = vrot.lane.b32.xlu0 %v992, 123
        %v998 = vpop.permute.xlu0 %997
        %v1001 = vadd.f32 %v987, %v996
        %v1002 = vadd.f32 %v988, %v998
        %s1003 = sld [smem:[#allocation2 + $0x3e]]
        %v1004 = vstv %s1003
        %v1005 = vmul.f32 %v1004, %v925
        %v1006 = vmul.f32 %v1004, %v926
        %1009 = vrot.lane.b32.xlu0 %v1005, 122
        %v1010 = vpop.permute.xlu0 %1009
        %1011 = vrot.lane.b32.xlu0 %v1006, 122
        %v1012 = vpop.permute.xlu0 %1011
        %v1015 = vadd.f32 %v1001, %v1010
        %v1016 = vadd.f32 %v1002, %v1012
        %s1017 = sadd.s32 %s359, 24
        %s1018 = scalar_lea.vmem %s169, %s1017
        %v1019 = vld [vmem:[%s1018] sm:$0xff]
        %v1020 = vld [vmem:[%s1018 + $0x8] sm:$0xff]
        %s1021 = sld [smem:[#allocation2 + $0x3f]]
        %v1022 = vstv %s1021
        %v1023 = vmul.f32 %v1022, %v1019
        %v1024 = vmul.f32 %v1022, %v1020
        %v1025 = vadd.f32 %v1015, %v1023
        %v1026 = vadd.f32 %v1016, %v1024
        %s1027 = sld [smem:[#allocation2 + $0x40]]
        %v1028 = vstv %s1027
        %v1029 = vmul.f32 %v1028, %v1019
        %v1030 = vmul.f32 %v1028, %v1020
        %1033 = vrot.lane.b32.xlu0 %v1029, 127
        %v1034 = vpop.permute.xlu0 %1033
        %1035 = vrot.lane.b32.xlu0 %v1030, 127
        %v1036 = vpop.permute.xlu0 %1035
        %v1039 = vadd.f32 %v1025, %v1034
        %v1040 = vadd.f32 %v1026, %v1036
        %s1041 = sld [smem:[#allocation2 + $0x41]]
        %v1042 = vstv %s1041
        %v1043 = vmul.f32 %v1042, %v1019
        %v1044 = vmul.f32 %v1042, %v1020
        %1047 = vrot.lane.b32.xlu0 %v1043, 126
        %v1048 = vpop.permute.xlu0 %1047
        %1049 = vrot.lane.b32.xlu0 %v1044, 126
        %v1050 = vpop.permute.xlu0 %1049
        %v1053 = vadd.f32 %v1039, %v1048
        %v1054 = vadd.f32 %v1040, %v1050
        %s1055 = sld [smem:[#allocation2 + $0x42]]
        %v1056 = vstv %s1055
        %v1057 = vmul.f32 %v1056, %v1019
        %v1058 = vmul.f32 %v1056, %v1020
        %1061 = vrot.lane.b32.xlu0 %v1057, 125
        %v1062 = vpop.permute.xlu0 %1061
        %1063 = vrot.lane.b32.xlu0 %v1058, 125
        %v1064 = vpop.permute.xlu0 %1063
        %v1067 = vadd.f32 %v1053, %v1062
        %v1068 = vadd.f32 %v1054, %v1064
        %s1069 = sld [smem:[#allocation2 + $0x43]]
        %v1070 = vstv %s1069
        %v1071 = vmul.f32 %v1070, %v1019
        %v1072 = vmul.f32 %v1070, %v1020
        %1075 = vrot.lane.b32.xlu0 %v1071, 124
        %v1076 = vpop.permute.xlu0 %1075
        %1077 = vrot.lane.b32.xlu0 %v1072, 124
        %v1078 = vpop.permute.xlu0 %1077
        %v1081 = vadd.f32 %v1067, %v1076
        %v1082 = vadd.f32 %v1068, %v1078
        %s1083 = sld [smem:[#allocation2 + $0x44]]
        %v1084 = vstv %s1083
        %v1085 = vmul.f32 %v1084, %v1019
        %v1086 = vmul.f32 %v1084, %v1020
        %1089 = vrot.lane.b32.xlu0 %v1085, 123
        %v1090 = vpop.permute.xlu0 %1089
        %1091 = vrot.lane.b32.xlu0 %v1086, 123
        %v1092 = vpop.permute.xlu0 %1091
        %v1095 = vadd.f32 %v1081, %v1090
        %v1096 = vadd.f32 %v1082, %v1092
        %s1097 = sld [smem:[#allocation2 + $0x45]]
        %v1098 = vstv %s1097
        %v1099 = vmul.f32 %v1098, %v1019
        %v1100 = vmul.f32 %v1098, %v1020
        %1103 = vrot.lane.b32.xlu0 %v1099, 122
        %v1104 = vpop.permute.xlu0 %1103
        %1105 = vrot.lane.b32.xlu0 %v1100, 122
        %v1106 = vpop.permute.xlu0 %1105
        %v1109 = vadd.f32 %v1095, %v1104
        %v1110 = vadd.f32 %v1096, %v1106
        %s1111 = sadd.s32 %s453, 24
        %s1112 = scalar_lea.vmem %s169, %s1111
        %v1113 = vld [vmem:[%s1112] sm:$0xff]
        %v1114 = vld [vmem:[%s1112 + $0x8] sm:$0xff]
        %s1115 = sld [smem:[#allocation2 + $0x46]]
        %v1116 = vstv %s1115
        %v1117 = vmul.f32 %v1116, %v1113
        %v1118 = vmul.f32 %v1116, %v1114
        %v1119 = vadd.f32 %v1109, %v1117
        %v1120 = vadd.f32 %v1110, %v1118
        %s1121 = sld [smem:[#allocation2 + $0x47]]
        %v1122 = vstv %s1121
        %v1123 = vmul.f32 %v1122, %v1113
        %v1124 = vmul.f32 %v1122, %v1114
        %1127 = vrot.lane.b32.xlu0 %v1123, 127
        %v1128 = vpop.permute.xlu0 %1127
        %1129 = vrot.lane.b32.xlu0 %v1124, 127
        %v1130 = vpop.permute.xlu0 %1129
        %v1133 = vadd.f32 %v1119, %v1128
        %v1134 = vadd.f32 %v1120, %v1130
        %s1135 = sld [smem:[#allocation2 + $0x48]]
        %v1136 = vstv %s1135
        %v1137 = vmul.f32 %v1136, %v1113
        %v1138 = vmul.f32 %v1136, %v1114
        %1141 = vrot.lane.b32.xlu0 %v1137, 126
        %v1142 = vpop.permute.xlu0 %1141
        %1143 = vrot.lane.b32.xlu0 %v1138, 126
        %v1144 = vpop.permute.xlu0 %1143
        %v1147 = vadd.f32 %v1133, %v1142
        %v1148 = vadd.f32 %v1134, %v1144
        %s1149 = sld [smem:[#allocation2 + $0x49]]
        %v1150 = vstv %s1149
        %v1151 = vmul.f32 %v1150, %v1113
        %v1152 = vmul.f32 %v1150, %v1114
        %1155 = vrot.lane.b32.xlu0 %v1151, 125
        %v1156 = vpop.permute.xlu0 %1155
        %1157 = vrot.lane.b32.xlu0 %v1152, 125
        %v1158 = vpop.permute.xlu0 %1157
        %v1161 = vadd.f32 %v1147, %v1156
        %v1162 = vadd.f32 %v1148, %v1158
        %s1163 = sld [smem:[#allocation2 + $0x4a]]
        %v1164 = vstv %s1163
        %v1165 = vmul.f32 %v1164, %v1113
        %v1166 = vmul.f32 %v1164, %v1114
        %1169 = vrot.lane.b32.xlu0 %v1165, 124
        %v1170 = vpop.permute.xlu0 %1169
        %1171 = vrot.lane.b32.xlu0 %v1166, 124
        %v1172 = vpop.permute.xlu0 %1171
        %v1175 = vadd.f32 %v1161, %v1170
        %v1176 = vadd.f32 %v1162, %v1172
        %s1177 = sld [smem:[#allocation2 + $0x4b]]
        %v1178 = vstv %s1177
        %v1179 = vmul.f32 %v1178, %v1113
        %v1180 = vmul.f32 %v1178, %v1114
        %1183 = vrot.lane.b32.xlu0 %v1179, 123
        %v1184 = vpop.permute.xlu0 %1183
        %1185 = vrot.lane.b32.xlu0 %v1180, 123
        %v1186 = vpop.permute.xlu0 %1185
        %v1189 = vadd.f32 %v1175, %v1184
        %v1190 = vadd.f32 %v1176, %v1186
        %s1191 = sld [smem:[#allocation2 + $0x4c]]
        %v1192 = vstv %s1191
        %v1193 = vmul.f32 %v1192, %v1113
        %v1194 = vmul.f32 %v1192, %v1114
        %1197 = vrot.lane.b32.xlu0 %v1193, 122
        %v1198 = vpop.permute.xlu0 %1197
        %1199 = vrot.lane.b32.xlu0 %v1194, 122
        %v1200 = vpop.permute.xlu0 %1199
        %v1203 = vadd.f32 %v1189, %v1198
        %v1204 = vadd.f32 %v1190, %v1200
        %s1205 = sadd.s32 %s547, 24
        %s1206 = scalar_lea.vmem %s169, %s1205
        %v1207 = vld [vmem:[%s1206] sm:$0xff]
        %v1208 = vld [vmem:[%s1206 + $0x8] sm:$0xff]
        %s1209 = sld [smem:[#allocation2 + $0x4d]]
        %v1210 = vstv %s1209
        %v1211 = vmul.f32 %v1210, %v1207
        %v1212 = vmul.f32 %v1210, %v1208
        %v1213 = vadd.f32 %v1203, %v1211
        %v1214 = vadd.f32 %v1204, %v1212
        %s1215 = sld [smem:[#allocation2 + $0x4e]]
        %v1216 = vstv %s1215
        %v1217 = vmul.f32 %v1216, %v1207
        %v1218 = vmul.f32 %v1216, %v1208
        %1221 = vrot.lane.b32.xlu0 %v1217, 127
        %v1222 = vpop.permute.xlu0 %1221
        %1223 = vrot.lane.b32.xlu0 %v1218, 127
        %v1224 = vpop.permute.xlu0 %1223
        %v1227 = vadd.f32 %v1213, %v1222
        %v1228 = vadd.f32 %v1214, %v1224
        %s1229 = sld [smem:[#allocation2 + $0x4f]]
        %v1230 = vstv %s1229
        %v1231 = vmul.f32 %v1230, %v1207
        %v1232 = vmul.f32 %v1230, %v1208
        %1235 = vrot.lane.b32.xlu0 %v1231, 126
        %v1236 = vpop.permute.xlu0 %1235
        %1237 = vrot.lane.b32.xlu0 %v1232, 126
        %v1238 = vpop.permute.xlu0 %1237
        %v1241 = vadd.f32 %v1227, %v1236
        %v1242 = vadd.f32 %v1228, %v1238
        %s1243 = sld [smem:[#allocation2 + $0x50]]
        %v1244 = vstv %s1243
        %v1245 = vmul.f32 %v1244, %v1207
        %v1246 = vmul.f32 %v1244, %v1208
        %1249 = vrot.lane.b32.xlu0 %v1245, 125
        %v1250 = vpop.permute.xlu0 %1249
        %1251 = vrot.lane.b32.xlu0 %v1246, 125
        %v1252 = vpop.permute.xlu0 %1251
        %v1255 = vadd.f32 %v1241, %v1250
        %v1256 = vadd.f32 %v1242, %v1252
        %s1257 = sld [smem:[#allocation2 + $0x51]]
        %v1258 = vstv %s1257
        %v1259 = vmul.f32 %v1258, %v1207
        %v1260 = vmul.f32 %v1258, %v1208
        %1263 = vrot.lane.b32.xlu0 %v1259, 124
        %v1264 = vpop.permute.xlu0 %1263
        %1265 = vrot.lane.b32.xlu0 %v1260, 124
        %v1266 = vpop.permute.xlu0 %1265
        %v1269 = vadd.f32 %v1255, %v1264
        %v1270 = vadd.f32 %v1256, %v1266
        %s1271 = sld [smem:[#allocation2 + $0x52]]
        %v1272 = vstv %s1271
        %v1273 = vmul.f32 %v1272, %v1207
        %v1274 = vmul.f32 %v1272, %v1208
        %1277 = vrot.lane.b32.xlu0 %v1273, 123
        %v1278 = vpop.permute.xlu0 %1277
        %1279 = vrot.lane.b32.xlu0 %v1274, 123
        %v1280 = vpop.permute.xlu0 %1279
        %v1283 = vadd.f32 %v1269, %v1278
        %v1284 = vadd.f32 %v1270, %v1280
        %s1285 = sld [smem:[#allocation2 + $0x53]]
        %v1286 = vstv %s1285
        %v1287 = vmul.f32 %v1286, %v1207
        %v1288 = vmul.f32 %v1286, %v1208
        %1291 = vrot.lane.b32.xlu0 %v1287, 122
        %v1292 = vpop.permute.xlu0 %1291
        %1293 = vrot.lane.b32.xlu0 %v1288, 122
        %v1294 = vpop.permute.xlu0 %1293
        %v1297 = vadd.f32 %v1283, %v1292
        %v1298 = vadd.f32 %v1284, %v1294
        %s1299 = sadd.s32 %s641, 24
        %s1300 = scalar_lea.vmem %s169, %s1299
        %v1301 = vld [vmem:[%s1300] sm:$0xff]
        %v1302 = vld [vmem:[%s1300 + $0x8] sm:$0xff]
        %s1303 = sld [smem:[#allocation2 + $0x54]]
        %v1304 = vstv %s1303
        %v1305 = vmul.f32 %v1304, %v1301
        %v1306 = vmul.f32 %v1304, %v1302
        %v1307 = vadd.f32 %v1297, %v1305
        %v1308 = vadd.f32 %v1298, %v1306
        %s1309 = sld [smem:[#allocation2 + $0x55]]
        %v1310 = vstv %s1309
        %v1311 = vmul.f32 %v1310, %v1301
        %v1312 = vmul.f32 %v1310, %v1302
        %1315 = vrot.lane.b32.xlu0 %v1311, 127
        %v1316 = vpop.permute.xlu0 %1315
        %1317 = vrot.lane.b32.xlu0 %v1312, 127
        %v1318 = vpop.permute.xlu0 %1317
        %v1321 = vadd.f32 %v1307, %v1316
        %v1322 = vadd.f32 %v1308, %v1318
        %s1323 = sld [smem:[#allocation2 + $0x56]]
        %v1324 = vstv %s1323
        %v1325 = vmul.f32 %v1324, %v1301
        %v1326 = vmul.f32 %v1324, %v1302
        %1329 = vrot.lane.b32.xlu0 %v1325, 126
        %v1330 = vpop.permute.xlu0 %1329
        %1331 = vrot.lane.b32.xlu0 %v1326, 126
        %v1332 = vpop.permute.xlu0 %1331
        %v1335 = vadd.f32 %v1321, %v1330
        %v1336 = vadd.f32 %v1322, %v1332
        %s1337 = sld [smem:[#allocation2 + $0x57]]
        %v1338 = vstv %s1337
        %v1339 = vmul.f32 %v1338, %v1301
        %v1340 = vmul.f32 %v1338, %v1302
        %1343 = vrot.lane.b32.xlu0 %v1339, 125
        %v1344 = vpop.permute.xlu0 %1343
        %1345 = vrot.lane.b32.xlu0 %v1340, 125
        %v1346 = vpop.permute.xlu0 %1345
        %v1349 = vadd.f32 %v1335, %v1344
        %v1350 = vadd.f32 %v1336, %v1346
        %s1351 = sld [smem:[#allocation2 + $0x58]]
        %v1352 = vstv %s1351
        %v1353 = vmul.f32 %v1352, %v1301
        %v1354 = vmul.f32 %v1352, %v1302
        %1357 = vrot.lane.b32.xlu0 %v1353, 124
        %v1358 = vpop.permute.xlu0 %1357
        %1359 = vrot.lane.b32.xlu0 %v1354, 124
        %v1360 = vpop.permute.xlu0 %1359
        %v1363 = vadd.f32 %v1349, %v1358
        %v1364 = vadd.f32 %v1350, %v1360
        %s1365 = sld [smem:[#allocation2 + $0x59]]
        %v1366 = vstv %s1365
        %v1367 = vmul.f32 %v1366, %v1301
        %v1368 = vmul.f32 %v1366, %v1302
        %1371 = vrot.lane.b32.xlu0 %v1367, 123
        %v1372 = vpop.permute.xlu0 %1371
        %1373 = vrot.lane.b32.xlu0 %v1368, 123
        %v1374 = vpop.permute.xlu0 %1373
        %v1377 = vadd.f32 %v1363, %v1372
        %v1378 = vadd.f32 %v1364, %v1374
        %s1379 = sld [smem:[#allocation2 + $0x5a]]
        %v1380 = vstv %s1379
        %v1381 = vmul.f32 %v1380, %v1301
        %v1382 = vmul.f32 %v1380, %v1302
        %1385 = vrot.lane.b32.xlu0 %v1381, 122
        %v1386 = vpop.permute.xlu0 %1385
        %1387 = vrot.lane.b32.xlu0 %v1382, 122
        %v1388 = vpop.permute.xlu0 %1387
        %v1391 = vadd.f32 %v1377, %v1386
        %v1392 = vadd.f32 %v1378, %v1388
        %s1393 = sadd.s32 %s735, 24
        %s1394 = scalar_lea.vmem %s169, %s1393
        %v1395 = vld [vmem:[%s1394] sm:$0xff]
        %v1396 = vld [vmem:[%s1394 + $0x8] sm:$0xff]
        %s1397 = sld [smem:[#allocation2 + $0x5b]]
        %v1398 = vstv %s1397
        %v1399 = vmul.f32 %v1398, %v1395
        %v1400 = vmul.f32 %v1398, %v1396
        %v1401 = vadd.f32 %v1391, %v1399
        %v1402 = vadd.f32 %v1392, %v1400
        %s1403 = sld [smem:[#allocation2 + $0x5c]]
        %v1404 = vstv %s1403
        %v1405 = vmul.f32 %v1404, %v1395
        %v1406 = vmul.f32 %v1404, %v1396
        %1409 = vrot.lane.b32.xlu0 %v1405, 127
        %v1410 = vpop.permute.xlu0 %1409
        %1411 = vrot.lane.b32.xlu0 %v1406, 127
        %v1412 = vpop.permute.xlu0 %1411
        %v1415 = vadd.f32 %v1401, %v1410
        %v1416 = vadd.f32 %v1402, %v1412
        %s1417 = sld [smem:[#allocation2 + $0x5d]]
        %v1418 = vstv %s1417
        %v1419 = vmul.f32 %v1418, %v1395
        %v1420 = vmul.f32 %v1418, %v1396
        %1423 = vrot.lane.b32.xlu0 %v1419, 126
        %v1424 = vpop.permute.xlu0 %1423
        %1425 = vrot.lane.b32.xlu0 %v1420, 126
        %v1426 = vpop.permute.xlu0 %1425
        %v1429 = vadd.f32 %v1415, %v1424
        %v1430 = vadd.f32 %v1416, %v1426
        %s1431 = sld [smem:[#allocation2 + $0x5e]]
        %v1432 = vstv %s1431
        %v1433 = vmul.f32 %v1432, %v1395
        %v1434 = vmul.f32 %v1432, %v1396
        %1437 = vrot.lane.b32.xlu0 %v1433, 125
        %v1438 = vpop.permute.xlu0 %1437
        %1439 = vrot.lane.b32.xlu0 %v1434, 125
        %v1440 = vpop.permute.xlu0 %1439
        %v1443 = vadd.f32 %v1429, %v1438
        %v1444 = vadd.f32 %v1430, %v1440
        %s1445 = sld [smem:[#allocation2 + $0x5f]]
        %v1446 = vstv %s1445
        %v1447 = vmul.f32 %v1446, %v1395
        %v1448 = vmul.f32 %v1446, %v1396
        %1451 = vrot.lane.b32.xlu0 %v1447, 124
        %v1452 = vpop.permute.xlu0 %1451
        %1453 = vrot.lane.b32.xlu0 %v1448, 124
        %v1454 = vpop.permute.xlu0 %1453
        %v1457 = vadd.f32 %v1443, %v1452
        %v1458 = vadd.f32 %v1444, %v1454
        %s1459 = sld [smem:[#allocation2 + $0x60]]
        %v1460 = vstv %s1459
        %v1461 = vmul.f32 %v1460, %v1395
        %v1462 = vmul.f32 %v1460, %v1396
        %1465 = vrot.lane.b32.xlu0 %v1461, 123
        %v1466 = vpop.permute.xlu0 %1465
        %1467 = vrot.lane.b32.xlu0 %v1462, 123
        %v1468 = vpop.permute.xlu0 %1467
        %v1471 = vadd.f32 %v1457, %v1466
        %v1472 = vadd.f32 %v1458, %v1468
        %s1473 = sld [smem:[#allocation2 + $0x61]]
        %v1474 = vstv %s1473
        %v1475 = vmul.f32 %v1474, %v1395
        %v1476 = vmul.f32 %v1474, %v1396
        %1479 = vrot.lane.b32.xlu0 %v1475, 122
        %v1480 = vpop.permute.xlu0 %1479
        %1481 = vrot.lane.b32.xlu0 %v1476, 122
        %v1482 = vpop.permute.xlu0 %1481
        %v1485 = vadd.f32 %v1471, %v1480
        %v1486 = vadd.f32 %v1472, %v1482
        %v1487 = vxor.u32 %v1485, 2147483648
        %v1488 = vxor.u32 %v1486, 2147483648
        %v1489 = vmul.f32 %v1487, 1.442695
        %v1490 = vpow.pop %v1489
        %v1491 = vmul.f32 %v1488, 1.442695
        %v1492 = vpow.pop %v1491
        %v1493 = vadd.f32 %v1490, 1.0
        %v1494 = vadd.f32 %v1492, 1.0
        %v1495 = vrcp.pop %v1493
        %v1496 = vmul.f32 %v1493, %v1495
        %v1497 = vsub.f32 1.0, %v1496
        %v1498 = vmul.f32 %v1495, %v1497
        %v1499 = vadd.f32 %v1495, %v1498
        %vm1500 = vweird.f32 %v1493
        %vm1501 = vweird.f32 %v1495
        %vm1502 = vmor %vm1500, %vm1501
        %v1503 = vsel %vm1502, %v1495, %v1499
        %v1504 = vand.u32 2147483647, %v1493
        %vm1505 = vcmp.eq.f32.partialorder %v1504, 8.507059e+37
        %v1506 = vand.u32 %v1493, 2147483648
        %v1507 = vor.u32 1.1754944e-38, %v1506
        %v1508 = vsel %vm1505, %v1507, %v1503
        %v1509 = vmul.f32 1.0, %v1508
        %v1510 = vrcp.pop %v1494
        %v1511 = vmul.f32 %v1494, %v1510
        %v1512 = vsub.f32 1.0, %v1511
        %v1513 = vmul.f32 %v1510, %v1512
        %v1514 = vadd.f32 %v1510, %v1513
        %vm1515 = vweird.f32 %v1494
        %vm1516 = vweird.f32 %v1510
        %vm1517 = vmor %vm1515, %vm1516
        %v1518 = vsel %vm1517, %v1510, %v1514
        %v1519 = vand.u32 2147483647, %v1494
        %vm1520 = vcmp.eq.f32.partialorder %v1519, 8.507059e+37
        %v1521 = vand.u32 %v1494, 2147483648
        %v1522 = vor.u32 1.1754944e-38, %v1521
        %v1523 = vsel %vm1520, %v1522, %v1518
        %v1524 = vmul.f32 1.0, %v1523
        %vm1525 = vcmask 130048
        %1526 = vst.msk [vmem:[%s164] sm:$0xff] %vm1525, %v1509
        %1527 = vst.msk [vmem:[%s164 + $0x8] sm:$0xff] %vm1525, %v1524
        %s1528 = sand.u32 %s86, 1
        %s1529 = scalar_lea.sflag [#allocation3], %s1528
        %s1530 = sand.u32 %s86, 1
        %s1531 = smul.addr %s1530, 16
        %s1532 = scalar_lea.vmem [#allocation5], %s1531
        // Predicated region
        $region33: #{spatial_attention.3} parent=27 // pred_check
          %p1533 = pneg %p96
        $region34: #{spatial_attention.3} parent=27 // pred_check_branch
          %1535 = sbr.rel (%p1533) target = $region36
        $region35: #{spatial_attention.3} parent=27 // pred_region
          %s1536 = smul.u32 2, %s22
          %1538 = vsyncadd %s1529, 0
          %s1539 = smul.addr %s21, 2
          %s1540 = sadd.s32 %s1536, %s1539
          %s1541 = smul.addr %s1540, 8
          %s1542 = scalar_lea.hbm %s2, %s1541
          %s1543 = sshll.u32 %s1532, 4
          %s1544 = int_to_ptr.vmem [resolvable:$true] %s1543
          %s1545 = sshll.u32 %s1542, 4
          %s1546 = int_to_ptr.hbm [resolvable:$true] %s1545
          %1551 = dma.vmem_to_hbm [thread:$0]  %s1544, 256, %s1546, %s1529, 128, 128, 8
        $region36: #{spatial_attention.3} parent=27 // pred_fallthru
          _
      $region28: #{spatial_attention.3} parent=5 // pred_fallthru
        _
      %p1552 = scmp.le.s32.totalorder 2, %s12
      // Predicated region
      $region37: #{spatial_attention.3} parent=5 // pred_check
        %p1553 = pneg %p1552
      $region38: #{spatial_attention.3} parent=5 // pred_check_branch
        %1555 = sbr.rel (%p1553) target = $region40
      $region39: #{spatial_attention.3} parent=5 // pred_region
        %s1556 = ssub.s32 %s12, 2
        // Predicated region
        $region41: #{spatial_attention.3} parent=39 // pred_check
          %p1557 = pneg %p102
        $region42: #{spatial_attention.3} parent=39 // pred_check_branch
          %1559 = sbr.rel (%p1557) target = $region44
        $region43: #{spatial_attention.3} parent=39 // pred_region
          %s1560 = sand.u32 %s87, 1
          %s1561 = scalar_lea.sflag [#allocation3], %s1560
          %s1562 = sand.u32 %s87, 1
          %s1563 = smul.addr %s1562, 16
          %s1564 = scalar_lea.vmem [#allocation5], %s1563
          %1566 = dma.done %s1561, 256
        $region44: #{spatial_attention.3} parent=39 // pred_fallthru
          _
      $region40: #{spatial_attention.3} parent=5 // pred_fallthru
        _
    $region6: #{spatial_attention.3} parent=1 // loop_footer
      %s16 = sadd.s32 1, %s12
    $region7: #{spatial_attention.3} parent=1 // loop_footer_branch
      %11 = sbr.rel target = $region3
    $region8: #{spatial_attention.3} parent=1 // loop_exit
      _
    %1567 = vsyncpa [#allocation3], 1
    %s1568 = scalar_lea.sflag [#allocation3], 1
    %1569 = vsyncpa %s1568, 1
    %1570 = vsyncpa [#allocation4], 1
    %s1571 = scalar_lea.sflag [#allocation4], 1
    %1572 = vsyncpa %s1571, 1

</llo_original>
